<compile_context>
chip_gen: v5e
topology: v5e:2x2
jax: 0.10.0
libtpu: 0.0.40
codegen_flags: <defaults>
</compile_context>

<pallas_src>
import jax
import jax.numpy as jnp
from jax.experimental import pallas as pl
from jax.experimental.pallas import tpu as pltpu


def _round_up(x: int, m: int) -> int:
    return ((x + m - 1) // m) * m


def _pick_lane_tile(extent: int, max_tile: int):
    """Tile for a lane-aligned (last-dim) extent: K or N.

    Prefers covering the whole extent with one block (legal even when the
    extent is not 128-aligned, since a block dim may equal the full array
    dim); otherwise pads to a multiple of 128 and picks the largest
    128-multiple tile <= max_tile that divides it (128 always does).
    Returns (tile, padded_extent)."""
    if extent <= max_tile:
        return extent, extent
    padded = _round_up(extent, 128)
    tile = max(128, (max_tile // 128) * 128)
    while padded % tile != 0:
        tile -= 128
    return tile, padded


def _pick_sublane_tile(extent: int, max_tile: int):
    """Tile for the sublane-aligned (second-to-last) extent: M.

    Prefers a single full block; otherwise a divisor of the 8-aligned extent
    that is a multiple of 8 and >= 128 rows (no padding); falls back to a
    128-row tile with < 128 rows of padding."""
    if extent <= max_tile:
        return extent, extent
    padded = _round_up(extent, 8)
    tile = max(8, (max_tile // 8) * 8)
    while tile >= 128:
        if padded % tile == 0:
            return tile, padded
        tile -= 8
    tile = min(128, max(8, (max_tile // 8) * 8))
    return tile, _round_up(padded, tile)


def _gnet_kernel(x_ref, w_ref, b_ref, o_ref, acc_ref):
    # x_ref: (tm, tk)   activation tile
    # w_ref: (tn, tk)   weight tile, PyTorch (N, dim) layout (no transpose)
    # b_ref: (1, tn)    bias tile
    # o_ref: (tm, tn)   output tile
    # acc_ref: (tm, tn) f32 accumulator, resident across the K grid axis.
    k = pl.program_id(2)

    @pl.when(k == 0)
    def _():
        # Fold the bias into the accumulator init: saves a (tm, tn) VPU add
        # in the finalize step.
        acc_ref[...] = jnp.broadcast_to(
            b_ref[...].astype(jnp.float32), acc_ref.shape
        )

    # x @ w.T ("NT" matmul): contract the K (last) dim of both tiles on MXU.
    acc_ref[...] += jax.lax.dot_general(
        x_ref[...],
        w_ref[...],
        dimension_numbers=(((1,), (1,)), ((), ())),
        preferred_element_type=jnp.float32,
    )

    @pl.when(k == pl.num_programs(2) - 1)
    def _():
        o_ref[...] = acc_ref[...].astype(o_ref.dtype)


def gnet_forward(x, weight, bias, *, tm=512, tn=512, tk=512,
                 min_pallas_flops=(1 << 24)):
    """y = x @ weight.T + bias (PyTorch nn.Linear forward) on TPU via Pallas.

    x:      (..., dim)
    weight: (N, dim)   -- PyTorch Linear layout, used as-is (no transpose)
    bias:   (N,)
    returns (..., N)
    """
    orig_shape = x.shape
    dim = orig_shape[-1]
    N = weight.shape[0]
    x2d = x.reshape(-1, dim)
    M = x2d.shape[0]

    # Tiny-problem fast path: below ~16 MFLOP the pad/slice + pallas_call
    # overhead cannot beat a plain XLA matmul.
    if 2 * M * N * dim < min_pallas_flops:
        y = (jnp.dot(x2d, weight.T) + bias).astype(x.dtype)
        return y.reshape(*orig_shape[:-1], N)

    # Tile selection: minimal padding; tiles divide the padded extents.
    tm, Mp = _pick_sublane_tile(M, tm)
    tn, Np = _pick_lane_tile(N, tn)
    tk, Kp = _pick_lane_tile(dim, tk)

    # Megacore (v7x: 2 TensorCores): if the whole problem is one (M, N) tile,
    # split M (preferred) or N so a "parallel" grid axis has >= 2 tiles.
    if Mp // tm == 1 and Np // tn == 1:
        if tm % 16 == 0:
            tm //= 2
        elif tn % 256 == 0:
            tn //= 2

    grid = (Mp // tm, Np // tn, Kp // tk)

    # Pad only where needed (zeros in K contribute nothing; padded M rows /
    # N cols are sliced off below).
    x_p = x2d
    if (Mp, Kp) != (M, dim):
        x_p = jnp.pad(x2d, ((0, Mp - M), (0, Kp - dim)))
    w_p = weight
    if (Np, Kp) != (N, dim):
        # TODO(synk): for repeated calls, pre-pad (and optionally bf16-cast)
        # the weight once outside the hot path instead of per call.
        w_p = jnp.pad(weight, ((0, Np - N), (0, Kp - dim)))
    b_p = bias if Np == N else jnp.pad(bias, (0, Np - N))
    b_p = b_p.reshape(1, Np)

    itemsize = jnp.dtype(x.dtype).itemsize
    # Double-buffered I/O tiles + f32 accumulator, plus headroom for Mosaic's
    # internal scratch; kept well under v7x's 64 MiB physical VMEM.
    tile_io_bytes = (tm * tk + tn * tk + tn + tm * tn) * itemsize
    vmem_bytes = 2 * tile_io_bytes + tm * tn * 4
    vmem_limit = int(min(max(2 * vmem_bytes + (8 << 20), 32 << 20), 56 << 20))

    cost = pl.CostEstimate(
        flops=2 * Mp * Np * Kp,
        transcendentals=0,
        bytes_accessed=itemsize * (Mp * Kp + Np * Kp + Mp * Np + Np),
    )

    out = pl.pallas_call(
        _gnet_kernel,
        out_shape=jax.ShapeDtypeStruct((Mp, Np), x.dtype),
        grid_spec=pltpu.PrefetchScalarGridSpec(
            num_scalar_prefetch=0,
            grid=grid,
            in_specs=[
                pl.BlockSpec((tm, tk), lambda i, j, k: (i, k)),   # x
                pl.BlockSpec((tn, tk), lambda i, j, k: (j, k)),   # weight (N, dim)
                pl.BlockSpec((1, tn), lambda i, j, k: (0, j)),    # bias
            ],
            out_specs=pl.BlockSpec((tm, tn), lambda i, j, k: (i, j)),
            scratch_shapes=[pltpu.VMEM((tm, tn), jnp.float32)],
        ),
        compiler_params=pltpu.CompilerParams(
            # K (reduction) axis last and "arbitrary"; M/N parallel for
            # megacore sharding.
            dimension_semantics=("parallel", "parallel", "arbitrary"),
            vmem_limit_bytes=vmem_limit,
        ),
        cost_estimate=cost,
    )(x_p, w_p, b_p)

    if (Mp, Np) != (M, N):
        out = out[:M, :N]
    return out.reshape(*orig_shape[:-1], N)


if __name__ == "__main__":
    key = jax.random.PRNGKey(0)
    keys = jax.random.split(key, 9)

    # 1) Shipped GNet shape (tiny): exercises the XLA fast path.
    N1, dim1, batch1, seq1 = 16, 32, 2, 8
    w1 = jax.random.normal(keys[0], (N1, dim1), jnp.float32) * 0.1
    b1 = jax.random.normal(keys[1], (N1,), jnp.float32) * 0.1
    x1 = jax.random.normal(keys[2], (batch1, seq1, dim1), jnp.float32)
    y1 = jax.block_until_ready(gnet_forward(x1, w1, b1))
    r1 = x1 @ w1.T + b1
    assert y1.shape == (batch1, seq1, N1)
    assert jnp.allclose(y1, r1, atol=1e-4, rtol=1e-4)

    # 2) Medium shape: exercises the Pallas path with full-extent (non-128)
    #    blocks, no weight padding, and the megacore M split (grid (2,1,1)).
    N2, dim2, batch2, seq2 = 320, 384, 4, 72      # M = 288
    w2 = jax.random.normal(keys[3], (N2, dim2), jnp.float32) * 0.05
    b2 = jax.random.normal(keys[4], (N2,), jnp.float32) * 0.05
    x2 = jax.random.normal(keys[5], (batch2, seq2, dim2), jnp.float32)
    y2 = jax.block_until_ready(gnet_forward(x2, w2, b2))
    r2 = x2 @ w2.T + b2
    assert y2.shape == (batch2, seq2, N2)
    assert jnp.allclose(y2, r2, atol=2e-3, rtol=2e-3)

    # 3) Multi-tile grid with K accumulation and the M-padding fallback
    #    (tile maxima lowered so every grid axis has several steps).
    N3, dim3, batch3, seq3 = 256, 640, 3, 88      # M = 264
    w3 = jax.random.normal(keys[6], (N3, dim3), jnp.float32) * 0.05
    b3 = jax.random.normal(keys[7], (N3,), jnp.float32) * 0.05
    x3 = jax.random.normal(keys[8], (batch3, seq3, dim3), jnp.float32)
    y3 = jax.block_until_ready(gnet_forward(x3, w3, b3, tm=128, tn=128, tk=256))
    r3 = x3 @ w3.T + b3
    assert y3.shape == (batch3, seq3, N3)
    assert jnp.allclose(y3, r3, atol=2e-3, rtol=2e-3)

    print("KERNEL_OK")
</pallas_src>

<mosaic_0001>
module attributes {stable_mosaic.version = 11 : i64} {
  func.func @_gnet_kernel(%arg0: i32, %arg1: i32, %arg2: i32, %arg3: memref<144x384xf32, #tpu.memory_space<vmem>>, %arg4: memref<320x384xf32, #tpu.memory_space<vmem>>, %arg5: memref<1x320xf32, #tpu.memory_space<vmem>>, %arg6: memref<144x320xf32, #tpu.memory_space<vmem>>, %arg7: memref<144x320xf32, #tpu.memory_space<vmem>>) attributes {dimension_semantics = [#tpu.dimension_semantics<parallel>, #tpu.dimension_semantics<parallel>, #tpu.dimension_semantics<arbitrary>], iteration_bounds = array<i64: 2, 1, 1>, scalar_prefetch = 0 : i64, scratch_operands = 1 : i64, tpu.core_type = #tpu.core_type<tc>, window_params = [{transform_indices = @transform_0, window_bounds = array<i64: 144, 384>}, {transform_indices = @transform_1, window_bounds = array<i64: 320, 384>}, {transform_indices = @transform_2, window_bounds = array<i64: 1, 320>}, {transform_indices = @transform_3, window_bounds = array<i64: 144, 320>}]} {
    %c0_i32 = arith.constant 0 : i32
    %0 = arith.cmpi eq, %arg2, %c0_i32 : i32
    %1 = arith.extui %0 : i1 to i32
    %c0_i32_0 = arith.constant 0 : i32
    %2 = arith.cmpi ne, %1, %c0_i32_0 : i32
    scf.if %2 {
      %c0_10 = arith.constant 0 : index
      %c0_11 = arith.constant 0 : index
      %12 = vector.load %arg5[%c0_10, %c0_11] : memref<1x320xf32, #tpu.memory_space<vmem>>, vector<1x320xf32>
      %13 = vector.shape_cast %12 : vector<1x320xf32> to vector<1x320xf32>
      %14 = vector.broadcast %13 : vector<1x320xf32> to vector<144x320xf32>
      %c0_12 = arith.constant 0 : index
      %c0_13 = arith.constant 0 : index
      %15 = vector.load %arg7[%c0_12, %c0_13] : memref<144x320xf32, #tpu.memory_space<vmem>>, vector<144x320xf32>
      tpu.vector_store %arg7[%c0_12, %c0_13], %14 {strides = array<i32>} : memref<144x320xf32, #tpu.memory_space<vmem>>, vector<144x320xf32>,
    } else {
    }
    %c0 = arith.constant 0 : index
    %c0_1 = arith.constant 0 : index
    %3 = vector.load %arg7[%c0, %c0_1] : memref<144x320xf32, #tpu.memory_space<vmem>>, vector<144x320xf32>
    %c0_2 = arith.constant 0 : index
    %c0_3 = arith.constant 0 : index
    %4 = vector.load %arg3[%c0_2, %c0_3] : memref<144x384xf32, #tpu.memory_space<vmem>>, vector<144x384xf32>
    %c0_4 = arith.constant 0 : index
    %c0_5 = arith.constant 0 : index
    %5 = vector.load %arg4[%c0_4, %c0_5] : memref<320x384xf32, #tpu.memory_space<vmem>>, vector<320x384xf32>
    %cst = arith.constant dense<0.000000e+00> : vector<144x320xf32>
    %6 = tpu.matmul %4, %5, %cst {dimension_numbers = #tpu.dot_dimension_numbers<[1], [1], [0], [0], [0, 0, 1, 0], [], []>} : vector<144x384xf32>, vector<320x384xf32>, vector<144x320xf32> -> vector<144x320xf32>
    %7 = arith.addf %3, %6 : vector<144x320xf32>
    %c0_6 = arith.constant 0 : index
    %c0_7 = arith.constant 0 : index
    %8 = vector.load %arg7[%c0_6, %c0_7] : memref<144x320xf32, #tpu.memory_space<vmem>>, vector<144x320xf32>
    tpu.vector_store %arg7[%c0_6, %c0_7], %7 {strides = array<i32>} : memref<144x320xf32, #tpu.memory_space<vmem>>, vector<144x320xf32>,
    %c0_i32_8 = arith.constant 0 : i32
    %9 = arith.cmpi eq, %arg2, %c0_i32_8 : i32
    %10 = arith.extui %9 : i1 to i32
    %c0_i32_9 = arith.constant 0 : i32
    %11 = arith.cmpi ne, %10, %c0_i32_9 : i32
    scf.if %11 {
      %c0_10 = arith.constant 0 : index
      %c0_11 = arith.constant 0 : index
      %12 = vector.load %arg7[%c0_10, %c0_11] : memref<144x320xf32, #tpu.memory_space<vmem>>, vector<144x320xf32>
      %c0_12 = arith.constant 0 : index
      %c0_13 = arith.constant 0 : index
      %13 = vector.load %arg6[%c0_12, %c0_13] : memref<144x320xf32, #tpu.memory_space<vmem>>, vector<144x320xf32>
      tpu.vector_store %arg6[%c0_12, %c0_13], %12 {strides = array<i32>} : memref<144x320xf32, #tpu.memory_space<vmem>>, vector<144x320xf32>,
    } else {
    }
    return
  }
  func.func @transform_0(%arg0: i32, %arg1: i32, %arg2: i32) -> (i32, i32) {
    %c0_i32 = arith.constant 0 : i32
    return %arg0, %arg2 : i32, i32
  }
  func.func @transform_1(%arg0: i32, %arg1: i32, %arg2: i32) -> (i32, i32) {
    %c0_i32 = arith.constant 0 : i32
    return %arg1, %arg2 : i32, i32
  }
  func.func @transform_2(%arg0: i32, %arg1: i32, %arg2: i32) -> (i32, i32) {
    %c0_i32 = arith.constant 0 : i32
    %c0_i32_0 = arith.constant 0 : i32
    return %c0_i32, %arg1 : i32, i32
  }
  func.func @transform_3(%arg0: i32, %arg1: i32, %arg2: i32) -> (i32, i32) {
    %c0_i32 = arith.constant 0 : i32
    return %arg0, %arg1 : i32, i32
  }
}

</mosaic_0001>

<llo_original>
// kernel: tpu_custom_call.1
$region0: #{tpu_custom_call.1}
  #allocation0 [shape = 'u32[]', space=smem, size = 0x4, offset = 0x4, fixed_abs, tag = 'smem constant byte address 0x4 - core index']
  #allocation1 [shape = 'u32[72,128]{1,0:T(1,128)}', space=vmem, size = 0x9000, scoped, tag = 'internal scratch']
  #allocation2 [shape = 'f32[144,320]{1,0:T(8,128)}', space=vmem, size = 0x36000, scoped, tag = 'scratch operand']
  %s0 = inlined_call_operand.hbm [shape: f32[288,384], index: 0, kind: input, shape index: {}]
  %s1 = inlined_call_operand.hbm [shape: f32[320,384], index: 1, kind: input, shape index: {}]
  %s2 = inlined_call_operand.hbm [shape: f32[1,320], index: 2, kind: input, shape index: {}]
  %s3 = inlined_call_operand.hbm [shape: f32[288,320], index: 3, kind: output, shape index: {}]
  %s4 = sld [smem:[#allocation0]]
  $region65: #{tpu_custom_call.1} parent=0
    _
  %s6 = ssub.s32 1, %s4
  %s7 = scalar_select 0, %s6, %s4
  $region1: #{tpu_custom_call.1} parent=0
    #allocation3 [shape = 'u8[442368]{0}', space=vmem, size = 0x6c000, scoped, tag = 'input window, operand 0']
    #allocation4 [shape = 's32[2]{0}', space=sflag, size = 0x8, scoped, tag = 'scoped memory for tpu_custom_call.1']
    #allocation5 [shape = 's32[2]{0}', space=sflag, size = 0x8, scoped, tag = 'scoped memory for tpu_custom_call.1']
    #allocation6 [shape = 'u8[491520]{0}', space=vmem, size = 0x78000, scoped, tag = 'input window, operand 1, single buffered']
    #allocation7 [shape = 's32[1]{0}', space=sflag, size = 0x4, scoped, tag = 'scoped memory for tpu_custom_call.1']
    #allocation8 [shape = 'u8[1536]{0}', space=vmem, size = 0x800, scoped, tag = 'input window, operand 2, single buffered']
    #allocation9 [shape = 'u8[442368]{0}', space=vmem, size = 0x6c000, scoped, tag = 'output window, operand 0']
    %8 = vsyncpa [#allocation4], 0
    %s9 = scalar_lea.sflag [#allocation4], 1
    %10 = vsyncpa %s9, 0
    %11 = vsyncpa [#allocation7], 0
    %12 = vsyncpa [#allocation5], 0
    %s13 = scalar_lea.sflag [#allocation5], 1
    %14 = vsyncpa %s13, 0
    loop: start=0, step=1, limit=4
    $region2: #{tpu_custom_call.1} parent=1 // loop_pre_header
      _
    $region3: #{tpu_custom_call.1} parent=1 // loop_header
      %s16 = sphi 0, %s20
      %p17 = scmp.ge.s32.totalorder %s16, 4
      %s23 = sphi 0, %s42
      %s24 = sphi 0, %s38
      %s25 = sphi 0, %s34
      %s26 = sphi 0, %s23
      %s27 = sphi 0, %s24
      %s28 = sphi 0, %s25
      %s29 = sphi 0, %s26
      %s30 = sphi 0, %s27
      %s31 = sphi 0, %s28
      %s47 = sphi 0, %s49
      %s50 = sphi 0, %s47
      %s51 = sphi 0, %s50
      %s67 = sphi 0, %s51
      %s75 = sphi 0, %s77
      %s78 = sphi 0, %s75
      %s79 = sphi 0, %s78
      %s95 = sphi 0, %s79
      %s101 = sphi 0, %s103
      %s104 = sphi 0, %s101
      %s105 = sphi 0, %s104
      %s121 = sphi 0, %s105
      %s129 = sphi 0, %s131
      %s132 = sphi 0, %s129
      %s133 = sphi 0, %s132
      %s149 = sphi 0, %s133
    $region4: #{tpu_custom_call.1} parent=1 // loop_header_branch
      %19 = sbr.rel (%p17) target = $region8
    $region5: #{tpu_custom_call.1} parent=1 // loop_body
      %s21 = ssub.s32 %s16, 1
      %s22 = ssub.s32 %s16, 2
      %s32 = sadd.s32 1, %s25
      %p33 = scmp.ge.s32.totalorder %s32, 1
      %s34 = scalar_select %p33, 0, %s32
      %s35 = sadd.s32 1, %s24
      %s36 = scalar_select %p33, %s35, %s24
      %p37 = scmp.ge.s32.totalorder %s36, 1
      %s38 = scalar_select %p37, 0, %s36
      %s39 = sadd.s32 1, %s23
      %s40 = scalar_select %p37, %s39, %s23
      %p41 = scmp.ge.s32.totalorder %s40, 2
      %s42 = scalar_select %p41, 0, %s40
      %s43 = ssub.s32 %s23, %s42
      %s44 = ssub.s32 %s25, %s34
      %s45 = sor.u32 %s43, %s44
      %p46 = scmp.eq.s32.totalorder %s45, 0
      %s48 = sadd.s32 %s47, 1
      %s49 = scalar_select %p46, %s47, %s48
      %p52 = pneg %p46
      %p53 = scmp.eq.s32.totalorder %s16, 1
      %p54 = por %p52, %p53
      %p55 = scmp.ne.s32.totalorder %s47, %s50
      %p56 = scmp.eq.s32.totalorder %s16, 0
      %p57 = por %p55, %p56
      %p58 = scmp.ne.s32.totalorder %s47, %s50
      %p59 = scmp.eq.s32.totalorder %s21, 1
      %p60 = por %p58, %p59
      %p61 = scmp.ne.s32.totalorder %s50, %s51
      %p62 = scmp.eq.s32.totalorder %s21, 0
      %p63 = por %p61, %p62
      %p64 = scmp.ne.s32.totalorder %s50, %s51
      %p65 = scmp.eq.s32.totalorder %s22, 1
      %p66 = por %p64, %p65
      %p68 = scmp.ne.s32.totalorder %s51, %s67
      %p69 = scmp.eq.s32.totalorder %s22, 0
      %p70 = por %p68, %p69
      %s71 = ssub.s32 %s24, %s38
      %s72 = ssub.s32 %s25, %s34
      %s73 = sor.u32 %s71, %s72
      %p74 = scmp.eq.s32.totalorder %s73, 0
      %s76 = sadd.s32 %s75, 1
      %s77 = scalar_select %p74, %s75, %s76
      %p80 = pneg %p74
      %p81 = scmp.eq.s32.totalorder %s16, 1
      %p82 = por %p80, %p81
      %p83 = scmp.ne.s32.totalorder %s75, %s78
      %p84 = scmp.eq.s32.totalorder %s16, 0
      %p85 = por %p83, %p84
      %p86 = scmp.ne.s32.totalorder %s75, %s78
      %p87 = scmp.eq.s32.totalorder %s21, 1
      %p88 = por %p86, %p87
      %p89 = scmp.ne.s32.totalorder %s78, %s79
      %p90 = scmp.eq.s32.totalorder %s21, 0
      %p91 = por %p89, %p90
      %p92 = scmp.ne.s32.totalorder %s78, %s79
      %p93 = scmp.eq.s32.totalorder %s22, 1
      %p94 = por %p92, %p93
      %p96 = scmp.ne.s32.totalorder %s79, %s95
      %p97 = scmp.eq.s32.totalorder %s22, 0
      %p98 = por %p96, %p97
      %s99 = ssub.s32 %s24, %s38
      %p100 = scmp.eq.s32.totalorder %s99, 0
      %s102 = sadd.s32 %s101, 1
      %s103 = scalar_select %p100, %s101, %s102
      %p106 = pneg %p100
      %p107 = scmp.eq.s32.totalorder %s16, 1
      %p108 = por %p106, %p107
      %p109 = scmp.ne.s32.totalorder %s101, %s104
      %p110 = scmp.eq.s32.totalorder %s16, 0
      %p111 = por %p109, %p110
      %p112 = scmp.ne.s32.totalorder %s101, %s104
      %p113 = scmp.eq.s32.totalorder %s21, 1
      %p114 = por %p112, %p113
      %p115 = scmp.ne.s32.totalorder %s104, %s105
      %p116 = scmp.eq.s32.totalorder %s21, 0
      %p117 = por %p115, %p116
      %p118 = scmp.ne.s32.totalorder %s104, %s105
      %p119 = scmp.eq.s32.totalorder %s22, 1
      %p120 = por %p118, %p119
      %p122 = scmp.ne.s32.totalorder %s105, %s121
      %p123 = scmp.eq.s32.totalorder %s22, 0
      %p124 = por %p122, %p123
      %s125 = ssub.s32 %s23, %s42
      %s126 = ssub.s32 %s24, %s38
      %s127 = sor.u32 %s125, %s126
      %p128 = scmp.eq.s32.totalorder %s127, 0
      %s130 = sadd.s32 %s129, 1
      %s131 = scalar_select %p128, %s129, %s130
      %p134 = pneg %p128
      %p135 = scmp.eq.s32.totalorder %s16, 1
      %p136 = por %p134, %p135
      %p137 = scmp.ne.s32.totalorder %s129, %s132
      %p138 = scmp.eq.s32.totalorder %s16, 0
      %p139 = por %p137, %p138
      %p140 = scmp.ne.s32.totalorder %s129, %s132
      %p141 = scmp.eq.s32.totalorder %s21, 1
      %p142 = por %p140, %p141
      %p143 = scmp.ne.s32.totalorder %s132, %s133
      %p144 = scmp.eq.s32.totalorder %s21, 0
      %p145 = por %p143, %p144
      %p146 = scmp.ne.s32.totalorder %s132, %s133
      %p147 = scmp.eq.s32.totalorder %s22, 1
      %p148 = por %p146, %p147
      %p150 = scmp.ne.s32.totalorder %s133, %s149
      %p151 = scmp.eq.s32.totalorder %s22, 0
      %p152 = por %p150, %p151
      %p153 = scmp.le.s32.totalorder 1, %s16
      %p154 = scmp.lt.s32.totalorder %s16, 3
      %p155 = pnand %p153, %p154
      %p156 = pneg %p155
      // Predicated region
      $region9: #{tpu_custom_call.1} parent=5 // pred_check
        _
      $region10: #{tpu_custom_call.1} parent=5 // pred_check_branch
        %158 = sbr.rel (%p155) target = $region12
      $region11: #{tpu_custom_call.1} parent=5 // pred_region
        %s159 = ssub.s32 %s16, 1
        // Predicated region
        $region13: #{tpu_custom_call.1} parent=11 // pred_check
          %p160 = pneg %p91
        $region14: #{tpu_custom_call.1} parent=11 // pred_check_branch
          %162 = sbr.rel (%p160) target = $region16
        $region15: #{tpu_custom_call.1} parent=11 // pred_region
          %s163 = smul.u32 40, %s27
          %s164 = smul.u32 3, %s28
          %166 = vsyncadd [#allocation7], 0
          %s167 = smul.addr %s163, 3
          %s168 = sadd.s32 %s164, %s167
          %s169 = smul.addr %s168, 8
          %s170 = scalar_lea.hbm %s1, %s169
          %s171 = sshll.u32 %s170, 4
          %s172 = int_to_ptr.hbm [resolvable:$true] %s171
          %s173 = sshll.u32 [#allocation6], 4
          %s174 = int_to_ptr.vmem [resolvable:$true] %s173
          %179 = dma.hbm_to_vmem [thread:$0]  %s172, 15360, %s174, [#allocation7], 384, 384, 24
        $region16: #{tpu_custom_call.1} parent=11 // pred_fallthru
          _
        // Predicated region
        $region17: #{tpu_custom_call.1} parent=11 // pred_check
          %p180 = pneg %p117
        $region18: #{tpu_custom_call.1} parent=11 // pred_check_branch
          %182 = sbr.rel (%p180) target = $region20
        $region19: #{tpu_custom_call.1} parent=11 // pred_region
          %s183 = smul.u32 3, %s27
          %185 = vsyncadd [#allocation7], 0
          %s186 = scalar_lea.hbm %s2, %s183
          %s188 = sshll.u32 %s186, 4
          %s189 = int_to_ptr.hbm [resolvable:$true] %s188
          %s190 = sshll.u32 [#allocation8], 4
          %s191 = int_to_ptr.vmem [resolvable:$true] %s190
          %193 = dma.hbm_to_vmem [thread:$0]  %s189, 48, %s191, [#allocation7]
        $region20: #{tpu_custom_call.1} parent=11 // pred_fallthru
          _
      $region12: #{tpu_custom_call.1} parent=5 // pred_fallthru
        _
      %p194 = scmp.lt.s32.totalorder %s16, 2
      // Predicated region
      $region21: #{tpu_custom_call.1} parent=5 // pred_check
        %p195 = pneg %p194
      $region22: #{tpu_custom_call.1} parent=5 // pred_check_branch
        %197 = sbr.rel (%p195) target = $region24
      $region23: #{tpu_custom_call.1} parent=5 // pred_region
        // Predicated region
        $region25: #{tpu_custom_call.1} parent=23 // pred_check
          %p198 = pneg %p57
        $region26: #{tpu_custom_call.1} parent=23 // pred_check_branch
          %200 = sbr.rel (%p198) target = $region28
        $region27: #{tpu_custom_call.1} parent=23 // pred_region
          %s201 = sand.u32 %s47, 1
          %s202 = scalar_lea.sflag [#allocation4], %s201
          %s203 = sand.u32 %s47, 1
          %s204 = smul.addr %s203, 432
          %s205 = scalar_lea.vmem [#allocation3], %s204
          %s206 = smul.u32 18, %s23
          %s207 = smul.u32 3, %s25
          %209 = vsyncadd %s202, 0
          %s210 = smul.addr %s206, 3
          %s211 = sadd.s32 %s207, %s210
          %s212 = smul.addr %s211, 8
          %s213 = scalar_lea.hbm %s0, %s212
          %s214 = sshll.u32 %s213, 4
          %s215 = int_to_ptr.hbm [resolvable:$true] %s214
          %s216 = sshll.u32 %s205, 4
          %s217 = int_to_ptr.vmem [resolvable:$true] %s216
          %222 = dma.hbm_to_vmem [thread:$0]  %s215, 6912, %s217, %s202, 384, 384, 24
        $region28: #{tpu_custom_call.1} parent=23 // pred_fallthru
          _
      $region24: #{tpu_custom_call.1} parent=5 // pred_fallthru
        _
      %p223 = scmp.le.s32.totalorder 1, %s16
      %p224 = scmp.lt.s32.totalorder %s16, 3
      %p225 = pnand %p223, %p224
      %p226 = pneg %p225
      // Predicated region
      $region29: #{tpu_custom_call.1} parent=5 // pred_check
        _
      $region30: #{tpu_custom_call.1} parent=5 // pred_check_branch
        %228 = sbr.rel (%p225) target = $region32
      $region31: #{tpu_custom_call.1} parent=5 // pred_region
        %s229 = ssub.s32 %s16, 1
        %s230 = sand.u32 %s50, 1
        %s231 = scalar_lea.sflag [#allocation4], %s230
        %s232 = sand.u32 %s50, 1
        %s233 = smul.addr %s232, 432
        %s234 = scalar_lea.vmem [#allocation3], %s233
        // Predicated region
        $region33: #{tpu_custom_call.1} parent=31 // pred_check
          %p235 = pneg %p63
        $region34: #{tpu_custom_call.1} parent=31 // pred_check_branch
          %237 = sbr.rel (%p235) target = $region36
        $region35: #{tpu_custom_call.1} parent=31 // pred_region
          %239 = dma.done %s231, 6912
        $region36: #{tpu_custom_call.1} parent=31 // pred_fallthru
          _
        // Predicated region
        $region37: #{tpu_custom_call.1} parent=31 // pred_check
          %p240 = pneg %p91
        $region38: #{tpu_custom_call.1} parent=31 // pred_check_branch
          %242 = sbr.rel (%p240) target = $region40
        $region39: #{tpu_custom_call.1} parent=31 // pred_region
          %244 = dma.done [#allocation7], 15360
        $region40: #{tpu_custom_call.1} parent=31 // pred_fallthru
          _
        // Predicated region
        $region41: #{tpu_custom_call.1} parent=31 // pred_check
          %p245 = pneg %p117
        $region42: #{tpu_custom_call.1} parent=31 // pred_check_branch
          %247 = sbr.rel (%p245) target = $region44
        $region43: #{tpu_custom_call.1} parent=31 // pred_region
          %249 = dma.done [#allocation7], 48
        $region44: #{tpu_custom_call.1} parent=31 // pred_fallthru
          _
        %s250 = sand.u32 %s50, 1
        %s251 = scalar_lea.sflag [#allocation4], %s250
        %s252 = sand.u32 %s50, 1
        %s253 = smul.addr %s252, 432
        %s254 = scalar_lea.vmem [#allocation3], %s253
        %p255 = pneg %p63
        %p256 = pneg %p60
        %p257 = pneg %p91
        %p258 = pneg %p88
        %p259 = pneg %p117
        %p260 = pneg %p114
        %p261 = pneg %p145
        %p262 = pneg %p142
        %s263 = sand.u32 %s132, 1
        %s264 = scalar_lea.sflag [#allocation5], %s263
        %s265 = sand.u32 %s132, 1
        %s266 = smul.addr %s265, 432
        %s267 = scalar_lea.vmem [#allocation9], %s266
        %s268 = smul.u32 18, %s26
        %s269 = smul.u32 3, %s28
        %s270 = smul.u32 40, %s27
        %s271 = smul.u32 3, %s28
        %s272 = smul.u32 3, %s27
        %s273 = smul.u32 18, %s26
        %s274 = smul.u32 3, %s27
        %p275 = scmp.eq.s32.totalorder %s28, 0
        // Predicated region
        $region45: #{tpu_custom_call.1} parent=31 // pred_check
          %p276 = pneg %p275
        $region46: #{tpu_custom_call.1} parent=31 // pred_check_branch
          %278 = sbr.rel (%p276) target = $region48
        $region47: #{tpu_custom_call.1} parent=31 // pred_region
          %v279 = vld [vmem:[#allocation8] sm:$0x7]
          %v281 = vperm.slane %v279, 0
          %v282 = vperm.slane %v279, 1
          %v283 = vperm.slane %v279, 2
          %287 = vst [vmem:[#allocation2] sm:$0xff] %v281
          %288 = vst [vmem:[#allocation2 + $0x8] sm:$0xff] %v282
          %vm289 = vcmask 523264
          %290 = vst.msk [vmem:[#allocation2 + $0x10] sm:$0xff] %vm289, %v283
          %291 = vst [vmem:[#allocation2 + $0x18] sm:$0xff] %v281
          %292 = vst [vmem:[#allocation2 + $0x20] sm:$0xff] %v282
          %293 = vst.msk [vmem:[#allocation2 + $0x28] sm:$0xff] %vm289, %v283
          %294 = vst [vmem:[#allocation2 + $0x30] sm:$0xff] %v281
          %295 = vst [vmem:[#allocation2 + $0x38] sm:$0xff] %v282
          %296 = vst.msk [vmem:[#allocation2 + $0x40] sm:$0xff] %vm289, %v283
          %297 = vst [vmem:[#allocation2 + $0x48] sm:$0xff] %v281
          %298 = vst [vmem:[#allocation2 + $0x50] sm:$0xff] %v282
          %299 = vst.msk [vmem:[#allocation2 + $0x58] sm:$0xff] %vm289, %v283
          %300 = vst [vmem:[#allocation2 + $0x60] sm:$0xff] %v281
          %301 = vst [vmem:[#allocation2 + $0x68] sm:$0xff] %v282
          %302 = vst.msk [vmem:[#allocation2 + $0x70] sm:$0xff] %vm289, %v283
          %303 = vst [vmem:[#allocation2 + $0x78] sm:$0xff] %v281
          %304 = vst [vmem:[#allocation2 + $0x80] sm:$0xff] %v282
          %305 = vst.msk [vmem:[#allocation2 + $0x88] sm:$0xff] %vm289, %v283
          %306 = vst [vmem:[#allocation2 + $0x90] sm:$0xff] %v281
          %307 = vst [vmem:[#allocation2 + $0x98] sm:$0xff] %v282
          %308 = vst.msk [vmem:[#allocation2 + $0xa0] sm:$0xff] %vm289, %v283
          %309 = vst [vmem:[#allocation2 + $0xa8] sm:$0xff] %v281
          %310 = vst [vmem:[#allocation2 + $0xb0] sm:$0xff] %v282
          %311 = vst.msk [vmem:[#allocation2 + $0xb8] sm:$0xff] %vm289, %v283
          %312 = vst [vmem:[#allocation2 + $0xc0] sm:$0xff] %v281
          %313 = vst [vmem:[#allocation2 + $0xc8] sm:$0xff] %v282
          %314 = vst.msk [vmem:[#allocation2 + $0xd0] sm:$0xff] %vm289, %v283
          %315 = vst [vmem:[#allocation2 + $0xd8] sm:$0xff] %v281
          %316 = vst [vmem:[#allocation2 + $0xe0] sm:$0xff] %v282
          %317 = vst.msk [vmem:[#allocation2 + $0xe8] sm:$0xff] %vm289, %v283
          %318 = vst [vmem:[#allocation2 + $0xf0] sm:$0xff] %v281
          %319 = vst [vmem:[#allocation2 + $0xf8] sm:$0xff] %v282
          %320 = vst.msk [vmem:[#allocation2 + $0x100] sm:$0xff] %vm289, %v283
          %321 = vst [vmem:[#allocation2 + $0x108] sm:$0xff] %v281
          %322 = vst [vmem:[#allocation2 + $0x110] sm:$0xff] %v282
          %323 = vst.msk [vmem:[#allocation2 + $0x118] sm:$0xff] %vm289, %v283
          %324 = vst [vmem:[#allocation2 + $0x120] sm:$0xff] %v281
          %325 = vst [vmem:[#allocation2 + $0x128] sm:$0xff] %v282
          %326 = vst.msk [vmem:[#allocation2 + $0x130] sm:$0xff] %vm289, %v283
          %327 = vst [vmem:[#allocation2 + $0x138] sm:$0xff] %v281
          %328 = vst [vmem:[#allocation2 + $0x140] sm:$0xff] %v282
          %329 = vst.msk [vmem:[#allocation2 + $0x148] sm:$0xff] %vm289, %v283
          %330 = vst [vmem:[#allocation2 + $0x150] sm:$0xff] %v281
          %331 = vst [vmem:[#allocation2 + $0x158] sm:$0xff] %v282
          %332 = vst.msk [vmem:[#allocation2 + $0x160] sm:$0xff] %vm289, %v283
          %333 = vst [vmem:[#allocation2 + $0x168] sm:$0xff] %v281
          %334 = vst [vmem:[#allocation2 + $0x170] sm:$0xff] %v282
          %335 = vst.msk [vmem:[#allocation2 + $0x178] sm:$0xff] %vm289, %v283
          %336 = vst [vmem:[#allocation2 + $0x180] sm:$0xff] %v281
          %337 = vst [vmem:[#allocation2 + $0x188] sm:$0xff] %v282
          %338 = vst.msk [vmem:[#allocation2 + $0x190] sm:$0xff] %vm289, %v283
          %339 = vst [vmem:[#allocation2 + $0x198] sm:$0xff] %v281
          %340 = vst [vmem:[#allocation2 + $0x1a0] sm:$0xff] %v282
          %341 = vst.msk [vmem:[#allocation2 + $0x1a8] sm:$0xff] %vm289, %v283
        $region48: #{tpu_custom_call.1} parent=31 // pred_fallthru
          _
        %v342 = vld [vmem:[#allocation2] sm:$0xff]
        %v343 = vld [vmem:[#allocation2 + $0x8] sm:$0xff]
        %v344 = vld [vmem:[#allocation2 + $0x10] sm:$0xff]
        %v345 = vld [vmem:[#allocation2 + $0x18] sm:$0xff]
        %v346 = vld [vmem:[#allocation2 + $0x20] sm:$0xff]
        %v347 = vld [vmem:[#allocation2 + $0x28] sm:$0xff]
        %v348 = vld [vmem:[#allocation2 + $0x30] sm:$0xff]
        %v349 = vld [vmem:[#allocation2 + $0x38] sm:$0xff]
        %v350 = vld [vmem:[#allocation2 + $0x40] sm:$0xff]
        %v351 = vld [vmem:[#allocation2 + $0x48] sm:$0xff]
        %v352 = vld [vmem:[#allocation2 + $0x50] sm:$0xff]
        %v353 = vld [vmem:[#allocation2 + $0x58] sm:$0xff]
        %v354 = vld [vmem:[#allocation2 + $0x60] sm:$0xff]
        %v355 = vld [vmem:[#allocation2 + $0x68] sm:$0xff]
        %v356 = vld [vmem:[#allocation2 + $0x70] sm:$0xff]
        %v357 = vld [vmem:[#allocation2 + $0x78] sm:$0xff]
        %v358 = vld [vmem:[#allocation2 + $0x80] sm:$0xff]
        %v359 = vld [vmem:[#allocation2 + $0x88] sm:$0xff]
        %v360 = vld [vmem:[#allocation2 + $0x90] sm:$0xff]
        %v361 = vld [vmem:[#allocation2 + $0x98] sm:$0xff]
        %v362 = vld [vmem:[#allocation2 + $0xa0] sm:$0xff]
        %v363 = vld [vmem:[#allocation2 + $0xa8] sm:$0xff]
        %v364 = vld [vmem:[#allocation2 + $0xb0] sm:$0xff]
        %v365 = vld [vmem:[#allocation2 + $0xb8] sm:$0xff]
        %v366 = vld [vmem:[#allocation2 + $0xc0] sm:$0xff]
        %v367 = vld [vmem:[#allocation2 + $0xc8] sm:$0xff]
        %v368 = vld [vmem:[#allocation2 + $0xd0] sm:$0xff]
        %v369 = vld [vmem:[#allocation2 + $0xd8] sm:$0xff]
        %v370 = vld [vmem:[#allocation2 + $0xe0] sm:$0xff]
        %v371 = vld [vmem:[#allocation2 + $0xe8] sm:$0xff]
        %v372 = vld [vmem:[#allocation2 + $0xf0] sm:$0xff]
        %v373 = vld [vmem:[#allocation2 + $0xf8] sm:$0xff]
        %v374 = vld [vmem:[#allocation2 + $0x100] sm:$0xff]
        %v375 = vld [vmem:[#allocation2 + $0x108] sm:$0xff]
        %v376 = vld [vmem:[#allocation2 + $0x110] sm:$0xff]
        %v377 = vld [vmem:[#allocation2 + $0x118] sm:$0xff]
        %v378 = vld [vmem:[#allocation2 + $0x120] sm:$0xff]
        %v379 = vld [vmem:[#allocation2 + $0x128] sm:$0xff]
        %v380 = vld [vmem:[#allocation2 + $0x130] sm:$0xff]
        %v381 = vld [vmem:[#allocation2 + $0x138] sm:$0xff]
        %v382 = vld [vmem:[#allocation2 + $0x140] sm:$0xff]
        %v383 = vld [vmem:[#allocation2 + $0x148] sm:$0xff]
        %v384 = vld [vmem:[#allocation2 + $0x150] sm:$0xff]
        %v385 = vld [vmem:[#allocation2 + $0x158] sm:$0xff]
        %v386 = vld [vmem:[#allocation2 + $0x160] sm:$0xff]
        %v387 = vld [vmem:[#allocation2 + $0x168] sm:$0xff]
        %v388 = vld [vmem:[#allocation2 + $0x170] sm:$0xff]
        %v389 = vld [vmem:[#allocation2 + $0x178] sm:$0xff]
        %v390 = vld [vmem:[#allocation2 + $0x180] sm:$0xff]
        %v391 = vld [vmem:[#allocation2 + $0x188] sm:$0xff]
        %v392 = vld [vmem:[#allocation2 + $0x190] sm:$0xff]
        %v393 = vld [vmem:[#allocation2 + $0x198] sm:$0xff]
        %v394 = vld [vmem:[#allocation2 + $0x1a0] sm:$0xff]
        %v395 = vld [vmem:[#allocation2 + $0x1a8] sm:$0xff]
        %v396 = vld [vmem:[%s234] sm:$0xff]
        %v397 = vld [vmem:[%s234 + $0x8] sm:$0xff]
        %v398 = vld [vmem:[%s234 + $0x10] sm:$0xff]
        %v399 = vld [vmem:[%s234 + $0x18] sm:$0xff]
        %v400 = vld [vmem:[%s234 + $0x20] sm:$0xff]
        %v401 = vld [vmem:[%s234 + $0x28] sm:$0xff]
        %v402 = vld [vmem:[%s234 + $0x30] sm:$0xff]
        %v403 = vld [vmem:[%s234 + $0x38] sm:$0xff]
        %v404 = vld [vmem:[%s234 + $0x40] sm:$0xff]
        %v405 = vld [vmem:[%s234 + $0x48] sm:$0xff]
        %v406 = vld [vmem:[%s234 + $0x50] sm:$0xff]
        %v407 = vld [vmem:[%s234 + $0x58] sm:$0xff]
        %v408 = vld [vmem:[%s234 + $0x60] sm:$0xff]
        %v409 = vld [vmem:[%s234 + $0x68] sm:$0xff]
        %v410 = vld [vmem:[%s234 + $0x70] sm:$0xff]
        %v411 = vld [vmem:[%s234 + $0x78] sm:$0xff]
        %v412 = vld [vmem:[%s234 + $0x80] sm:$0xff]
        %v413 = vld [vmem:[%s234 + $0x88] sm:$0xff]
        %v414 = vld [vmem:[%s234 + $0x90] sm:$0xff]
        %v415 = vld [vmem:[%s234 + $0x98] sm:$0xff]
        %v416 = vld [vmem:[%s234 + $0xa0] sm:$0xff]
        %v417 = vld [vmem:[%s234 + $0xa8] sm:$0xff]
        %v418 = vld [vmem:[%s234 + $0xb0] sm:$0xff]
        %v419 = vld [vmem:[%s234 + $0xb8] sm:$0xff]
        %v420 = vld [vmem:[%s234 + $0xc0] sm:$0xff]
        %v421 = vld [vmem:[%s234 + $0xc8] sm:$0xff]
        %v422 = vld [vmem:[%s234 + $0xd0] sm:$0xff]
        %v423 = vld [vmem:[%s234 + $0xd8] sm:$0xff]
        %v424 = vld [vmem:[%s234 + $0xe0] sm:$0xff]
        %v425 = vld [vmem:[%s234 + $0xe8] sm:$0xff]
        %v426 = vld [vmem:[%s234 + $0xf0] sm:$0xff]
        %v427 = vld [vmem:[%s234 + $0xf8] sm:$0xff]
        %v428 = vld [vmem:[%s234 + $0x100] sm:$0xff]
        %v429 = vld [vmem:[%s234 + $0x108] sm:$0xff]
        %v430 = vld [vmem:[%s234 + $0x110] sm:$0xff]
        %v431 = vld [vmem:[%s234 + $0x118] sm:$0xff]
        %v432 = vld [vmem:[%s234 + $0x120] sm:$0xff]
        %v433 = vld [vmem:[%s234 + $0x128] sm:$0xff]
        %v434 = vld [vmem:[%s234 + $0x130] sm:$0xff]
        %v435 = vld [vmem:[%s234 + $0x138] sm:$0xff]
        %v436 = vld [vmem:[%s234 + $0x140] sm:$0xff]
        %v437 = vld [vmem:[%s234 + $0x148] sm:$0xff]
        %v438 = vld [vmem:[%s234 + $0x150] sm:$0xff]
        %v439 = vld [vmem:[%s234 + $0x158] sm:$0xff]
        %v440 = vld [vmem:[%s234 + $0x160] sm:$0xff]
        %v441 = vld [vmem:[%s234 + $0x168] sm:$0xff]
        %v442 = vld [vmem:[%s234 + $0x170] sm:$0xff]
        %v443 = vld [vmem:[%s234 + $0x178] sm:$0xff]
        %v444 = vld [vmem:[%s234 + $0x180] sm:$0xff]
        %v445 = vld [vmem:[%s234 + $0x188] sm:$0xff]
        %v446 = vld [vmem:[%s234 + $0x190] sm:$0xff]
        %v447 = vld [vmem:[%s234 + $0x198] sm:$0xff]
        %v448 = vld [vmem:[%s234 + $0x1a0] sm:$0xff]
        %v449 = vld [vmem:[%s234 + $0x1a8] sm:$0xff]
        %v450 = vld [vmem:[#allocation6] sm:$0xff]
        %v451 = vld [vmem:[#allocation6 + $0x8] sm:$0xff]
        %v452 = vld [vmem:[#allocation6 + $0x10] sm:$0xff]
        %v453 = vld [vmem:[#allocation6 + $0x18] sm:$0xff]
        %v454 = vld [vmem:[#allocation6 + $0x20] sm:$0xff]
        %v455 = vld [vmem:[#allocation6 + $0x28] sm:$0xff]
        %v456 = vld [vmem:[#allocation6 + $0x30] sm:$0xff]
        %v457 = vld [vmem:[#allocation6 + $0x38] sm:$0xff]
        %v458 = vld [vmem:[#allocation6 + $0x40] sm:$0xff]
        %v459 = vld [vmem:[#allocation6 + $0x48] sm:$0xff]
        %v460 = vld [vmem:[#allocation6 + $0x50] sm:$0xff]
        %v461 = vld [vmem:[#allocation6 + $0x58] sm:$0xff]
        %v462 = vld [vmem:[#allocation6 + $0x60] sm:$0xff]
        %v463 = vld [vmem:[#allocation6 + $0x68] sm:$0xff]
        %v464 = vld [vmem:[#allocation6 + $0x70] sm:$0xff]
        %v465 = vld [vmem:[#allocation6 + $0x78] sm:$0xff]
        %v466 = vld [vmem:[#allocation6 + $0x80] sm:$0xff]
        %v467 = vld [vmem:[#allocation6 + $0x88] sm:$0xff]
        %v468 = vld [vmem:[#allocation6 + $0x90] sm:$0xff]
        %v469 = vld [vmem:[#allocation6 + $0x98] sm:$0xff]
        %v470 = vld [vmem:[#allocation6 + $0xa0] sm:$0xff]
        %v471 = vld [vmem:[#allocation6 + $0xa8] sm:$0xff]
        %v472 = vld [vmem:[#allocation6 + $0xb0] sm:$0xff]
        %v473 = vld [vmem:[#allocation6 + $0xb8] sm:$0xff]
        %v474 = vld [vmem:[#allocation6 + $0xc0] sm:$0xff]
        %v475 = vld [vmem:[#allocation6 + $0xc8] sm:$0xff]
        %v476 = vld [vmem:[#allocation6 + $0xd0] sm:$0xff]
        %v477 = vld [vmem:[#allocation6 + $0xd8] sm:$0xff]
        %v478 = vld [vmem:[#allocation6 + $0xe0] sm:$0xff]
        %v479 = vld [vmem:[#allocation6 + $0xe8] sm:$0xff]
        %v480 = vld [vmem:[#allocation6 + $0xf0] sm:$0xff]
        %v481 = vld [vmem:[#allocation6 + $0xf8] sm:$0xff]
        %v482 = vld [vmem:[#allocation6 + $0x100] sm:$0xff]
        %v483 = vld [vmem:[#allocation6 + $0x108] sm:$0xff]
        %v484 = vld [vmem:[#allocation6 + $0x110] sm:$0xff]
        %v485 = vld [vmem:[#allocation6 + $0x118] sm:$0xff]
        %v486 = vld [vmem:[#allocation6 + $0x120] sm:$0xff]
        %v487 = vld [vmem:[#allocation6 + $0x128] sm:$0xff]
        %v488 = vld [vmem:[#allocation6 + $0x130] sm:$0xff]
        %v489 = vld [vmem:[#allocation6 + $0x138] sm:$0xff]
        %v490 = vld [vmem:[#allocation6 + $0x140] sm:$0xff]
        %v491 = vld [vmem:[#allocation6 + $0x148] sm:$0xff]
        %v492 = vld [vmem:[#allocation6 + $0x150] sm:$0xff]
        %v493 = vld [vmem:[#allocation6 + $0x158] sm:$0xff]
        %v494 = vld [vmem:[#allocation6 + $0x160] sm:$0xff]
        %v495 = vld [vmem:[#allocation6 + $0x168] sm:$0xff]
        %v496 = vld [vmem:[#allocation6 + $0x170] sm:$0xff]
        %v497 = vld [vmem:[#allocation6 + $0x178] sm:$0xff]
        %v498 = vld [vmem:[#allocation6 + $0x180] sm:$0xff]
        %v499 = vld [vmem:[#allocation6 + $0x188] sm:$0xff]
        %v500 = vld [vmem:[#allocation6 + $0x190] sm:$0xff]
        %v501 = vld [vmem:[#allocation6 + $0x198] sm:$0xff]
        %v502 = vld [vmem:[#allocation6 + $0x1a0] sm:$0xff]
        %v503 = vld [vmem:[#allocation6 + $0x1a8] sm:$0xff]
        %v504 = vld [vmem:[#allocation6 + $0x1b0] sm:$0xff]
        %v505 = vld [vmem:[#allocation6 + $0x1b8] sm:$0xff]
        %v506 = vld [vmem:[#allocation6 + $0x1c0] sm:$0xff]
        %v507 = vld [vmem:[#allocation6 + $0x1c8] sm:$0xff]
        %v508 = vld [vmem:[#allocation6 + $0x1d0] sm:$0xff]
        %v509 = vld [vmem:[#allocation6 + $0x1d8] sm:$0xff]
        %v510 = vld [vmem:[#allocation6 + $0x1e0] sm:$0xff]
        %v511 = vld [vmem:[#allocation6 + $0x1e8] sm:$0xff]
        %v512 = vld [vmem:[#allocation6 + $0x1f0] sm:$0xff]
        %v513 = vld [vmem:[#allocation6 + $0x1f8] sm:$0xff]
        %v514 = vld [vmem:[#allocation6 + $0x200] sm:$0xff]
        %v515 = vld [vmem:[#allocation6 + $0x208] sm:$0xff]
        %v516 = vld [vmem:[#allocation6 + $0x210] sm:$0xff]
        %v517 = vld [vmem:[#allocation6 + $0x218] sm:$0xff]
        %v518 = vld [vmem:[#allocation6 + $0x220] sm:$0xff]
        %v519 = vld [vmem:[#allocation6 + $0x228] sm:$0xff]
        %v520 = vld [vmem:[#allocation6 + $0x230] sm:$0xff]
        %v521 = vld [vmem:[#allocation6 + $0x238] sm:$0xff]
        %v522 = vld [vmem:[#allocation6 + $0x240] sm:$0xff]
        %v523 = vld [vmem:[#allocation6 + $0x248] sm:$0xff]
        %v524 = vld [vmem:[#allocation6 + $0x250] sm:$0xff]
        %v525 = vld [vmem:[#allocation6 + $0x258] sm:$0xff]
        %v526 = vld [vmem:[#allocation6 + $0x260] sm:$0xff]
        %v527 = vld [vmem:[#allocation6 + $0x268] sm:$0xff]
        %v528 = vld [vmem:[#allocation6 + $0x270] sm:$0xff]
        %v529 = vld [vmem:[#allocation6 + $0x278] sm:$0xff]
        %v530 = vld [vmem:[#allocation6 + $0x280] sm:$0xff]
        %v531 = vld [vmem:[#allocation6 + $0x288] sm:$0xff]
        %v532 = vld [vmem:[#allocation6 + $0x290] sm:$0xff]
        %v533 = vld [vmem:[#allocation6 + $0x298] sm:$0xff]
        %v534 = vld [vmem:[#allocation6 + $0x2a0] sm:$0xff]
        %v535 = vld [vmem:[#allocation6 + $0x2a8] sm:$0xff]
        %v536 = vld [vmem:[#allocation6 + $0x2b0] sm:$0xff]
        %v537 = vld [vmem:[#allocation6 + $0x2b8] sm:$0xff]
        %v538 = vld [vmem:[#allocation6 + $0x2c0] sm:$0xff]
        %v539 = vld [vmem:[#allocation6 + $0x2c8] sm:$0xff]
        %v540 = vld [vmem:[#allocation6 + $0x2d0] sm:$0xff]
        %v541 = vld [vmem:[#allocation6 + $0x2d8] sm:$0xff]
        %v542 = vld [vmem:[#allocation6 + $0x2e0] sm:$0xff]
        %v543 = vld [vmem:[#allocation6 + $0x2e8] sm:$0xff]
        %v544 = vld [vmem:[#allocation6 + $0x2f0] sm:$0xff]
        %v545 = vld [vmem:[#allocation6 + $0x2f8] sm:$0xff]
        %v546 = vld [vmem:[#allocation6 + $0x300] sm:$0xff]
        %v547 = vld [vmem:[#allocation6 + $0x308] sm:$0xff]
        %v548 = vld [vmem:[#allocation6 + $0x310] sm:$0xff]
        %v549 = vld [vmem:[#allocation6 + $0x318] sm:$0xff]
        %v550 = vld [vmem:[#allocation6 + $0x320] sm:$0xff]
        %v551 = vld [vmem:[#allocation6 + $0x328] sm:$0xff]
        %v552 = vld [vmem:[#allocation6 + $0x330] sm:$0xff]
        %v553 = vld [vmem:[#allocation6 + $0x338] sm:$0xff]
        %v554 = vld [vmem:[#allocation6 + $0x340] sm:$0xff]
        %v555 = vld [vmem:[#allocation6 + $0x348] sm:$0xff]
        %v556 = vld [vmem:[#allocation6 + $0x350] sm:$0xff]
        %v557 = vld [vmem:[#allocation6 + $0x358] sm:$0xff]
        %v558 = vld [vmem:[#allocation6 + $0x360] sm:$0xff]
        %v559 = vld [vmem:[#allocation6 + $0x368] sm:$0xff]
        %v560 = vld [vmem:[#allocation6 + $0x370] sm:$0xff]
        %v561 = vld [vmem:[#allocation6 + $0x378] sm:$0xff]
        %v562 = vld [vmem:[#allocation6 + $0x380] sm:$0xff]
        %v563 = vld [vmem:[#allocation6 + $0x388] sm:$0xff]
        %v564 = vld [vmem:[#allocation6 + $0x390] sm:$0xff]
        %v565 = vld [vmem:[#allocation6 + $0x398] sm:$0xff]
        %v566 = vld [vmem:[#allocation6 + $0x3a0] sm:$0xff]
        %v567 = vld [vmem:[#allocation6 + $0x3a8] sm:$0xff]
        %v568 = vld [vmem:[#allocation6 + $0x3b0] sm:$0xff]
        %v569 = vld [vmem:[#allocation6 + $0x3b8] sm:$0xff]
        %570 = vmatpush.xpose.msra.mxu0 %v495
        %571 = vmatpush.xpose.msra.mxu0 %v492
        %572 = vmatpush.xpose.msra.mxu0 %v489
        %573 = vmatpush.xpose.msra.mxu0 %v486
        %574 = vmatpush.xpose.msra.mxu0 %v483
        %575 = vmatpush.xpose.msra.mxu0 %v480
        %576 = vmatpush.xpose.msra.mxu0 %v477
        %577 = vmatpush.xpose.msra.mxu0 %v474
        %578 = vmatpush.xpose.msra.mxu0 %v471
        %579 = vmatpush.xpose.msra.mxu0 %v468
        %580 = vmatpush.xpose.msra.mxu0 %v465
        %581 = vmatpush.xpose.msra.mxu0 %v462
        %582 = vmatpush.xpose.msra.mxu0 %v459
        %583 = vmatpush.xpose.msra.mxu0 %v456
        %584 = vmatpush.xpose.msra.mxu0 %v453
        %585 = vmatpush.xpose.msra.mxu0 %v450
        %586 = vmatmul.f32.gmra.mxu0 %v396
        %v587 = vpop.f32.mrf.mxu0
        %v588 = vadd.f32 0.0, %v587
        %589 = vmatmul.f32.gmra.mxu0 %v399
        %v590 = vpop.f32.mrf.mxu0
        %v591 = vadd.f32 0.0, %v590
        %592 = vmatmul.f32.gmra.mxu0 %v402
        %v593 = vpop.f32.mrf.mxu0
        %v594 = vadd.f32 0.0, %v593
        %595 = vmatmul.f32.gmra.mxu0 %v405
        %v596 = vpop.f32.mrf.mxu0
        %v597 = vadd.f32 0.0, %v596
        %598 = vmatmul.f32.gmra.mxu0 %v408
        %v599 = vpop.f32.mrf.mxu0
        %v600 = vadd.f32 0.0, %v599
        %601 = vmatmul.f32.gmra.mxu0 %v411
        %v602 = vpop.f32.mrf.mxu0
        %v603 = vadd.f32 0.0, %v602
        %604 = vmatmul.f32.gmra.mxu0 %v414
        %v605 = vpop.f32.mrf.mxu0
        %v606 = vadd.f32 0.0, %v605
        %607 = vmatmul.f32.gmra.mxu0 %v417
        %v608 = vpop.f32.mrf.mxu0
        %v609 = vadd.f32 0.0, %v608
        %610 = vmatmul.f32.gmra.mxu0 %v420
        %v611 = vpop.f32.mrf.mxu0
        %v612 = vadd.f32 0.0, %v611
        %613 = vmatmul.f32.gmra.mxu0 %v423
        %v614 = vpop.f32.mrf.mxu0
        %v615 = vadd.f32 0.0, %v614
        %616 = vmatmul.f32.gmra.mxu0 %v426
        %v617 = vpop.f32.mrf.mxu0
        %v618 = vadd.f32 0.0, %v617
        %619 = vmatmul.f32.gmra.mxu0 %v429
        %v620 = vpop.f32.mrf.mxu0
        %v621 = vadd.f32 0.0, %v620
        %622 = vmatmul.f32.gmra.mxu0 %v432
        %v623 = vpop.f32.mrf.mxu0
        %v624 = vadd.f32 0.0, %v623
        %625 = vmatmul.f32.gmra.mxu0 %v435
        %v626 = vpop.f32.mrf.mxu0
        %v627 = vadd.f32 0.0, %v626
        %628 = vmatmul.f32.gmra.mxu0 %v438
        %v629 = vpop.f32.mrf.mxu0
        %v630 = vadd.f32 0.0, %v629
        %631 = vmatmul.f32.gmra.mxu0 %v441
        %v632 = vpop.f32.mrf.mxu0
        %v633 = vadd.f32 0.0, %v632
        %634 = vmatmul.f32.gmra.mxu0 %v444
        %v635 = vpop.f32.mrf.mxu0
        %v636 = vadd.f32 0.0, %v635
        %637 = vmatmul.f32.gmra.mxu0 %v447
        %v638 = vpop.f32.mrf.mxu0
        %v639 = vadd.f32 0.0, %v638
        %640 = vdwg.mxu0
        %641 = vmatpush.xpose.msra.mxu0 %v496
        %642 = vmatpush.xpose.msra.mxu0 %v493
        %643 = vmatpush.xpose.msra.mxu0 %v490
        %644 = vmatpush.xpose.msra.mxu0 %v487
        %645 = vmatpush.xpose.msra.mxu0 %v484
        %646 = vmatpush.xpose.msra.mxu0 %v481
        %647 = vmatpush.xpose.msra.mxu0 %v478
        %648 = vmatpush.xpose.msra.mxu0 %v475
        %649 = vmatpush.xpose.msra.mxu0 %v472
        %650 = vmatpush.xpose.msra.mxu0 %v469
        %651 = vmatpush.xpose.msra.mxu0 %v466
        %652 = vmatpush.xpose.msra.mxu0 %v463
        %653 = vmatpush.xpose.msra.mxu0 %v460
        %654 = vmatpush.xpose.msra.mxu0 %v457
        %655 = vmatpush.xpose.msra.mxu0 %v454
        %656 = vmatpush.xpose.msra.mxu0 %v451
        %657 = vmatmul.f32.gmra.mxu0 %v397
        %v658 = vpop.f32.mrf.mxu0
        %v659 = vadd.f32 %v588, %v658
        %660 = vmatmul.f32.gmra.mxu0 %v400
        %v661 = vpop.f32.mrf.mxu0
        %v662 = vadd.f32 %v591, %v661
        %663 = vmatmul.f32.gmra.mxu0 %v403
        %v664 = vpop.f32.mrf.mxu0
        %v665 = vadd.f32 %v594, %v664
        %666 = vmatmul.f32.gmra.mxu0 %v406
        %v667 = vpop.f32.mrf.mxu0
        %v668 = vadd.f32 %v597, %v667
        %669 = vmatmul.f32.gmra.mxu0 %v409
        %v670 = vpop.f32.mrf.mxu0
        %v671 = vadd.f32 %v600, %v670
        %672 = vmatmul.f32.gmra.mxu0 %v412
        %v673 = vpop.f32.mrf.mxu0
        %v674 = vadd.f32 %v603, %v673
        %675 = vmatmul.f32.gmra.mxu0 %v415
        %v676 = vpop.f32.mrf.mxu0
        %v677 = vadd.f32 %v606, %v676
        %678 = vmatmul.f32.gmra.mxu0 %v418
        %v679 = vpop.f32.mrf.mxu0
        %v680 = vadd.f32 %v609, %v679
        %681 = vmatmul.f32.gmra.mxu0 %v421
        %v682 = vpop.f32.mrf.mxu0
        %v683 = vadd.f32 %v612, %v682
        %684 = vmatmul.f32.gmra.mxu0 %v424
        %v685 = vpop.f32.mrf.mxu0
        %v686 = vadd.f32 %v615, %v685
        %687 = vmatmul.f32.gmra.mxu0 %v427
        %v688 = vpop.f32.mrf.mxu0
        %v689 = vadd.f32 %v618, %v688
        %690 = vmatmul.f32.gmra.mxu0 %v430
        %v691 = vpop.f32.mrf.mxu0
        %v692 = vadd.f32 %v621, %v691
        %693 = vmatmul.f32.gmra.mxu0 %v433
        %v694 = vpop.f32.mrf.mxu0
        %v695 = vadd.f32 %v624, %v694
        %696 = vmatmul.f32.gmra.mxu0 %v436
        %v697 = vpop.f32.mrf.mxu0
        %v698 = vadd.f32 %v627, %v697
        %699 = vmatmul.f32.gmra.mxu0 %v439
        %v700 = vpop.f32.mrf.mxu0
        %v701 = vadd.f32 %v630, %v700
        %702 = vmatmul.f32.gmra.mxu0 %v442
        %v703 = vpop.f32.mrf.mxu0
        %v704 = vadd.f32 %v633, %v703
        %705 = vmatmul.f32.gmra.mxu0 %v445
        %v706 = vpop.f32.mrf.mxu0
        %v707 = vadd.f32 %v636, %v706
        %708 = vmatmul.f32.gmra.mxu0 %v448
        %v709 = vpop.f32.mrf.mxu0
        %v710 = vadd.f32 %v639, %v709
        %711 = vdwg.mxu0
        %712 = vmatpush.xpose.msra.mxu0 %v497
        %713 = vmatpush.xpose.msra.mxu0 %v494
        %714 = vmatpush.xpose.msra.mxu0 %v491
        %715 = vmatpush.xpose.msra.mxu0 %v488
        %716 = vmatpush.xpose.msra.mxu0 %v485
        %717 = vmatpush.xpose.msra.mxu0 %v482
        %718 = vmatpush.xpose.msra.mxu0 %v479
        %719 = vmatpush.xpose.msra.mxu0 %v476
        %720 = vmatpush.xpose.msra.mxu0 %v473
        %721 = vmatpush.xpose.msra.mxu0 %v470
        %722 = vmatpush.xpose.msra.mxu0 %v467
        %723 = vmatpush.xpose.msra.mxu0 %v464
        %724 = vmatpush.xpose.msra.mxu0 %v461
        %725 = vmatpush.xpose.msra.mxu0 %v458
        %726 = vmatpush.xpose.msra.mxu0 %v455
        %727 = vmatpush.xpose.msra.mxu0 %v452
        %728 = vmatmul.f32.gmra.mxu0 %v398
        %v729 = vpop.f32.mrf.mxu0
        %v730 = vadd.f32 %v659, %v729
        %731 = vmatmul.f32.gmra.mxu0 %v401
        %v732 = vpop.f32.mrf.mxu0
        %v733 = vadd.f32 %v662, %v732
        %734 = vmatmul.f32.gmra.mxu0 %v404
        %v735 = vpop.f32.mrf.mxu0
        %v736 = vadd.f32 %v665, %v735
        %737 = vmatmul.f32.gmra.mxu0 %v407
        %v738 = vpop.f32.mrf.mxu0
        %v739 = vadd.f32 %v668, %v738
        %740 = vmatmul.f32.gmra.mxu0 %v410
        %v741 = vpop.f32.mrf.mxu0
        %v742 = vadd.f32 %v671, %v741
        %743 = vmatmul.f32.gmra.mxu0 %v413
        %v744 = vpop.f32.mrf.mxu0
        %v745 = vadd.f32 %v674, %v744
        %746 = vmatmul.f32.gmra.mxu0 %v416
        %v747 = vpop.f32.mrf.mxu0
        %v748 = vadd.f32 %v677, %v747
        %749 = vmatmul.f32.gmra.mxu0 %v419
        %v750 = vpop.f32.mrf.mxu0
        %v751 = vadd.f32 %v680, %v750
        %752 = vmatmul.f32.gmra.mxu0 %v422
        %v753 = vpop.f32.mrf.mxu0
        %v754 = vadd.f32 %v683, %v753
        %755 = vmatmul.f32.gmra.mxu0 %v425
        %v756 = vpop.f32.mrf.mxu0
        %v757 = vadd.f32 %v686, %v756
        %758 = vmatmul.f32.gmra.mxu0 %v428
        %v759 = vpop.f32.mrf.mxu0
        %v760 = vadd.f32 %v689, %v759
        %761 = vmatmul.f32.gmra.mxu0 %v431
        %v762 = vpop.f32.mrf.mxu0
        %v763 = vadd.f32 %v692, %v762
        %764 = vmatmul.f32.gmra.mxu0 %v434
        %v765 = vpop.f32.mrf.mxu0
        %v766 = vadd.f32 %v695, %v765
        %767 = vmatmul.f32.gmra.mxu0 %v437
        %v768 = vpop.f32.mrf.mxu0
        %v769 = vadd.f32 %v698, %v768
        %770 = vmatmul.f32.gmra.mxu0 %v440
        %v771 = vpop.f32.mrf.mxu0
        %v772 = vadd.f32 %v701, %v771
        %773 = vmatmul.f32.gmra.mxu0 %v443
        %v774 = vpop.f32.mrf.mxu0
        %v775 = vadd.f32 %v704, %v774
        %776 = vmatmul.f32.gmra.mxu0 %v446
        %v777 = vpop.f32.mrf.mxu0
        %v778 = vadd.f32 %v707, %v777
        %779 = vmatmul.f32.gmra.mxu0 %v449
        %v780 = vpop.f32.mrf.mxu0
        %v781 = vadd.f32 %v710, %v780
        %782 = vdwg.mxu0
        %783 = vmatpush.xpose.msra.mxu0 %v543
        %784 = vmatpush.xpose.msra.mxu0 %v540
        %785 = vmatpush.xpose.msra.mxu0 %v537
        %786 = vmatpush.xpose.msra.mxu0 %v534
        %787 = vmatpush.xpose.msra.mxu0 %v531
        %788 = vmatpush.xpose.msra.mxu0 %v528
        %789 = vmatpush.xpose.msra.mxu0 %v525
        %790 = vmatpush.xpose.msra.mxu0 %v522
        %791 = vmatpush.xpose.msra.mxu0 %v519
        %792 = vmatpush.xpose.msra.mxu0 %v516
        %793 = vmatpush.xpose.msra.mxu0 %v513
        %794 = vmatpush.xpose.msra.mxu0 %v510
        %795 = vmatpush.xpose.msra.mxu0 %v507
        %796 = vmatpush.xpose.msra.mxu0 %v504
        %797 = vmatpush.xpose.msra.mxu0 %v501
        %798 = vmatpush.xpose.msra.mxu0 %v498
        %799 = vmatmul.f32.gmra.mxu0 %v396
        %v800 = vpop.f32.mrf.mxu0
        %v801 = vadd.f32 0.0, %v800
        %802 = vmatmul.f32.gmra.mxu0 %v399
        %v803 = vpop.f32.mrf.mxu0
        %v804 = vadd.f32 0.0, %v803
        %805 = vmatmul.f32.gmra.mxu0 %v402
        %v806 = vpop.f32.mrf.mxu0
        %v807 = vadd.f32 0.0, %v806
        %808 = vmatmul.f32.gmra.mxu0 %v405
        %v809 = vpop.f32.mrf.mxu0
        %v810 = vadd.f32 0.0, %v809
        %811 = vmatmul.f32.gmra.mxu0 %v408
        %v812 = vpop.f32.mrf.mxu0
        %v813 = vadd.f32 0.0, %v812
        %814 = vmatmul.f32.gmra.mxu0 %v411
        %v815 = vpop.f32.mrf.mxu0
        %v816 = vadd.f32 0.0, %v815
        %817 = vmatmul.f32.gmra.mxu0 %v414
        %v818 = vpop.f32.mrf.mxu0
        %v819 = vadd.f32 0.0, %v818
        %820 = vmatmul.f32.gmra.mxu0 %v417
        %v821 = vpop.f32.mrf.mxu0
        %v822 = vadd.f32 0.0, %v821
        %823 = vmatmul.f32.gmra.mxu0 %v420
        %v824 = vpop.f32.mrf.mxu0
        %v825 = vadd.f32 0.0, %v824
        %826 = vmatmul.f32.gmra.mxu0 %v423
        %v827 = vpop.f32.mrf.mxu0
        %v828 = vadd.f32 0.0, %v827
        %829 = vmatmul.f32.gmra.mxu0 %v426
        %v830 = vpop.f32.mrf.mxu0
        %v831 = vadd.f32 0.0, %v830
        %832 = vmatmul.f32.gmra.mxu0 %v429
        %v833 = vpop.f32.mrf.mxu0
        %v834 = vadd.f32 0.0, %v833
        %835 = vmatmul.f32.gmra.mxu0 %v432
        %v836 = vpop.f32.mrf.mxu0
        %v837 = vadd.f32 0.0, %v836
        %838 = vmatmul.f32.gmra.mxu0 %v435
        %v839 = vpop.f32.mrf.mxu0
        %v840 = vadd.f32 0.0, %v839
        %841 = vmatmul.f32.gmra.mxu0 %v438
        %v842 = vpop.f32.mrf.mxu0
        %v843 = vadd.f32 0.0, %v842
        %844 = vmatmul.f32.gmra.mxu0 %v441
        %v845 = vpop.f32.mrf.mxu0
        %v846 = vadd.f32 0.0, %v845
        %847 = vmatmul.f32.gmra.mxu0 %v444
        %v848 = vpop.f32.mrf.mxu0
        %v849 = vadd.f32 0.0, %v848
        %850 = vmatmul.f32.gmra.mxu0 %v447
        %v851 = vpop.f32.mrf.mxu0
        %v852 = vadd.f32 0.0, %v851
        %853 = vdwg.mxu0
        %854 = vmatpush.xpose.msra.mxu0 %v544
        %855 = vmatpush.xpose.msra.mxu0 %v541
        %856 = vmatpush.xpose.msra.mxu0 %v538
        %857 = vmatpush.xpose.msra.mxu0 %v535
        %858 = vmatpush.xpose.msra.mxu0 %v532
        %859 = vmatpush.xpose.msra.mxu0 %v529
        %860 = vmatpush.xpose.msra.mxu0 %v526
        %861 = vmatpush.xpose.msra.mxu0 %v523
        %862 = vmatpush.xpose.msra.mxu0 %v520
        %863 = vmatpush.xpose.msra.mxu0 %v517
        %864 = vmatpush.xpose.msra.mxu0 %v514
        %865 = vmatpush.xpose.msra.mxu0 %v511
        %866 = vmatpush.xpose.msra.mxu0 %v508
        %867 = vmatpush.xpose.msra.mxu0 %v505
        %868 = vmatpush.xpose.msra.mxu0 %v502
        %869 = vmatpush.xpose.msra.mxu0 %v499
        %870 = vmatmul.f32.gmra.mxu0 %v397
        %v871 = vpop.f32.mrf.mxu0
        %v872 = vadd.f32 %v801, %v871
        %873 = vmatmul.f32.gmra.mxu0 %v400
        %v874 = vpop.f32.mrf.mxu0
        %v875 = vadd.f32 %v804, %v874
        %876 = vmatmul.f32.gmra.mxu0 %v403
        %v877 = vpop.f32.mrf.mxu0
        %v878 = vadd.f32 %v807, %v877
        %879 = vmatmul.f32.gmra.mxu0 %v406
        %v880 = vpop.f32.mrf.mxu0
        %v881 = vadd.f32 %v810, %v880
        %882 = vmatmul.f32.gmra.mxu0 %v409
        %v883 = vpop.f32.mrf.mxu0
        %v884 = vadd.f32 %v813, %v883
        %885 = vmatmul.f32.gmra.mxu0 %v412
        %v886 = vpop.f32.mrf.mxu0
        %v887 = vadd.f32 %v816, %v886
        %888 = vmatmul.f32.gmra.mxu0 %v415
        %v889 = vpop.f32.mrf.mxu0
        %v890 = vadd.f32 %v819, %v889
        %891 = vmatmul.f32.gmra.mxu0 %v418
        %v892 = vpop.f32.mrf.mxu0
        %v893 = vadd.f32 %v822, %v892
        %894 = vmatmul.f32.gmra.mxu0 %v421
        %v895 = vpop.f32.mrf.mxu0
        %v896 = vadd.f32 %v825, %v895
        %897 = vmatmul.f32.gmra.mxu0 %v424
        %v898 = vpop.f32.mrf.mxu0
        %v899 = vadd.f32 %v828, %v898
        %900 = vmatmul.f32.gmra.mxu0 %v427
        %v901 = vpop.f32.mrf.mxu0
        %v902 = vadd.f32 %v831, %v901
        %903 = vmatmul.f32.gmra.mxu0 %v430
        %v904 = vpop.f32.mrf.mxu0
        %v905 = vadd.f32 %v834, %v904
        %906 = vmatmul.f32.gmra.mxu0 %v433
        %v907 = vpop.f32.mrf.mxu0
        %v908 = vadd.f32 %v837, %v907
        %909 = vmatmul.f32.gmra.mxu0 %v436
        %v910 = vpop.f32.mrf.mxu0
        %v911 = vadd.f32 %v840, %v910
        %912 = vmatmul.f32.gmra.mxu0 %v439
        %v913 = vpop.f32.mrf.mxu0
        %v914 = vadd.f32 %v843, %v913
        %915 = vmatmul.f32.gmra.mxu0 %v442
        %v916 = vpop.f32.mrf.mxu0
        %v917 = vadd.f32 %v846, %v916
        %918 = vmatmul.f32.gmra.mxu0 %v445
        %v919 = vpop.f32.mrf.mxu0
        %v920 = vadd.f32 %v849, %v919
        %921 = vmatmul.f32.gmra.mxu0 %v448
        %v922 = vpop.f32.mrf.mxu0
        %v923 = vadd.f32 %v852, %v922
        %924 = vdwg.mxu0
        %925 = vmatpush.xpose.msra.mxu0 %v545
        %926 = vmatpush.xpose.msra.mxu0 %v542
        %927 = vmatpush.xpose.msra.mxu0 %v539
        %928 = vmatpush.xpose.msra.mxu0 %v536
        %929 = vmatpush.xpose.msra.mxu0 %v533
        %930 = vmatpush.xpose.msra.mxu0 %v530
        %931 = vmatpush.xpose.msra.mxu0 %v527
        %932 = vmatpush.xpose.msra.mxu0 %v524
        %933 = vmatpush.xpose.msra.mxu0 %v521
        %934 = vmatpush.xpose.msra.mxu0 %v518
        %935 = vmatpush.xpose.msra.mxu0 %v515
        %936 = vmatpush.xpose.msra.mxu0 %v512
        %937 = vmatpush.xpose.msra.mxu0 %v509
        %938 = vmatpush.xpose.msra.mxu0 %v506
        %939 = vmatpush.xpose.msra.mxu0 %v503
        %940 = vmatpush.xpose.msra.mxu0 %v500
        %941 = vmatmul.f32.gmra.mxu0 %v398
        %v942 = vpop.f32.mrf.mxu0
        %v943 = vadd.f32 %v872, %v942
        %944 = vmatmul.f32.gmra.mxu0 %v401
        %v945 = vpop.f32.mrf.mxu0
        %v946 = vadd.f32 %v875, %v945
        %947 = vmatmul.f32.gmra.mxu0 %v404
        %v948 = vpop.f32.mrf.mxu0
        %v949 = vadd.f32 %v878, %v948
        %950 = vmatmul.f32.gmra.mxu0 %v407
        %v951 = vpop.f32.mrf.mxu0
        %v952 = vadd.f32 %v881, %v951
        %953 = vmatmul.f32.gmra.mxu0 %v410
        %v954 = vpop.f32.mrf.mxu0
        %v955 = vadd.f32 %v884, %v954
        %956 = vmatmul.f32.gmra.mxu0 %v413
        %v957 = vpop.f32.mrf.mxu0
        %v958 = vadd.f32 %v887, %v957
        %959 = vmatmul.f32.gmra.mxu0 %v416
        %v960 = vpop.f32.mrf.mxu0
        %v961 = vadd.f32 %v890, %v960
        %962 = vmatmul.f32.gmra.mxu0 %v419
        %v963 = vpop.f32.mrf.mxu0
        %v964 = vadd.f32 %v893, %v963
        %965 = vmatmul.f32.gmra.mxu0 %v422
        %v966 = vpop.f32.mrf.mxu0
        %v967 = vadd.f32 %v896, %v966
        %968 = vmatmul.f32.gmra.mxu0 %v425
        %v969 = vpop.f32.mrf.mxu0
        %v970 = vadd.f32 %v899, %v969
        %971 = vmatmul.f32.gmra.mxu0 %v428
        %v972 = vpop.f32.mrf.mxu0
        %v973 = vadd.f32 %v902, %v972
        %974 = vmatmul.f32.gmra.mxu0 %v431
        %v975 = vpop.f32.mrf.mxu0
        %v976 = vadd.f32 %v905, %v975
        %977 = vmatmul.f32.gmra.mxu0 %v434
        %v978 = vpop.f32.mrf.mxu0
        %v979 = vadd.f32 %v908, %v978
        %980 = vmatmul.f32.gmra.mxu0 %v437
        %v981 = vpop.f32.mrf.mxu0
        %v982 = vadd.f32 %v911, %v981
        %983 = vmatmul.f32.gmra.mxu0 %v440
        %v984 = vpop.f32.mrf.mxu0
        %v985 = vadd.f32 %v914, %v984
        %986 = vmatmul.f32.gmra.mxu0 %v443
        %v987 = vpop.f32.mrf.mxu0
        %v988 = vadd.f32 %v917, %v987
        %989 = vmatmul.f32.gmra.mxu0 %v446
        %v990 = vpop.f32.mrf.mxu0
        %v991 = vadd.f32 %v920, %v990
        %992 = vmatmul.f32.gmra.mxu0 %v449
        %v993 = vpop.f32.mrf.mxu0
        %v994 = vadd.f32 %v923, %v993
        %995 = vdwg.mxu0
        %996 = vmatpush.xpose.msra.mxu0 0.0
        %997 = vmatpush.xpose.msra.mxu0 0.0
        %998 = vmatpush.xpose.msra.mxu0 0.0
        %999 = vmatpush.xpose.msra.mxu0 0.0
        %1000 = vmatpush.xpose.msra.mxu0 0.0
        %1001 = vmatpush.xpose.msra.mxu0 0.0
        %1002 = vmatpush.xpose.msra.mxu0 0.0
        %1003 = vmatpush.xpose.msra.mxu0 0.0
        %1004 = vmatpush.xpose.msra.mxu0 %v567
        %1005 = vmatpush.xpose.msra.mxu0 %v564
        %1006 = vmatpush.xpose.msra.mxu0 %v561
        %1007 = vmatpush.xpose.msra.mxu0 %v558
        %1008 = vmatpush.xpose.msra.mxu0 %v555
        %1009 = vmatpush.xpose.msra.mxu0 %v552
        %1010 = vmatpush.xpose.msra.mxu0 %v549
        %1011 = vmatpush.xpose.msra.mxu0 %v546
        %1012 = vmatmul.f32.gmra.mxu0 %v396
        %v1013 = vpop.f32.mrf.mxu0
        %v1014 = vadd.f32 0.0, %v1013
        %1015 = vmatmul.f32.gmra.mxu0 %v399
        %v1016 = vpop.f32.mrf.mxu0
        %v1017 = vadd.f32 0.0, %v1016
        %1018 = vmatmul.f32.gmra.mxu0 %v402
        %v1019 = vpop.f32.mrf.mxu0
        %v1020 = vadd.f32 0.0, %v1019
        %1021 = vmatmul.f32.gmra.mxu0 %v405
        %v1022 = vpop.f32.mrf.mxu0
        %v1023 = vadd.f32 0.0, %v1022
        %1024 = vmatmul.f32.gmra.mxu0 %v408
        %v1025 = vpop.f32.mrf.mxu0
        %v1026 = vadd.f32 0.0, %v1025
        %1027 = vmatmul.f32.gmra.mxu0 %v411
        %v1028 = vpop.f32.mrf.mxu0
        %v1029 = vadd.f32 0.0, %v1028
        %1030 = vmatmul.f32.gmra.mxu0 %v414
        %v1031 = vpop.f32.mrf.mxu0
        %v1032 = vadd.f32 0.0, %v1031
        %1033 = vmatmul.f32.gmra.mxu0 %v417
        %v1034 = vpop.f32.mrf.mxu0
        %v1035 = vadd.f32 0.0, %v1034
        %1036 = vmatmul.f32.gmra.mxu0 %v420
        %v1037 = vpop.f32.mrf.mxu0
        %v1038 = vadd.f32 0.0, %v1037
        %1039 = vmatmul.f32.gmra.mxu0 %v423
        %v1040 = vpop.f32.mrf.mxu0
        %v1041 = vadd.f32 0.0, %v1040
        %1042 = vmatmul.f32.gmra.mxu0 %v426
        %v1043 = vpop.f32.mrf.mxu0
        %v1044 = vadd.f32 0.0, %v1043
        %1045 = vmatmul.f32.gmra.mxu0 %v429
        %v1046 = vpop.f32.mrf.mxu0
        %v1047 = vadd.f32 0.0, %v1046
        %1048 = vmatmul.f32.gmra.mxu0 %v432
        %v1049 = vpop.f32.mrf.mxu0
        %v1050 = vadd.f32 0.0, %v1049
        %1051 = vmatmul.f32.gmra.mxu0 %v435
        %v1052 = vpop.f32.mrf.mxu0
        %v1053 = vadd.f32 0.0, %v1052
        %1054 = vmatmul.f32.gmra.mxu0 %v438
        %v1055 = vpop.f32.mrf.mxu0
        %v1056 = vadd.f32 0.0, %v1055
        %1057 = vmatmul.f32.gmra.mxu0 %v441
        %v1058 = vpop.f32.mrf.mxu0
        %v1059 = vadd.f32 0.0, %v1058
        %1060 = vmatmul.f32.gmra.mxu0 %v444
        %v1061 = vpop.f32.mrf.mxu0
        %v1062 = vadd.f32 0.0, %v1061
        %1063 = vmatmul.f32.gmra.mxu0 %v447
        %v1064 = vpop.f32.mrf.mxu0
        %v1065 = vadd.f32 0.0, %v1064
        %1066 = vdwg.mxu0
        %1067 = vmatpush.xpose.msra.mxu0 0.0
        %1068 = vmatpush.xpose.msra.mxu0 0.0
        %1069 = vmatpush.xpose.msra.mxu0 0.0
        %1070 = vmatpush.xpose.msra.mxu0 0.0
        %1071 = vmatpush.xpose.msra.mxu0 0.0
        %1072 = vmatpush.xpose.msra.mxu0 0.0
        %1073 = vmatpush.xpose.msra.mxu0 0.0
        %1074 = vmatpush.xpose.msra.mxu0 0.0
        %1075 = vmatpush.xpose.msra.mxu0 %v568
        %1076 = vmatpush.xpose.msra.mxu0 %v565
        %1077 = vmatpush.xpose.msra.mxu0 %v562
        %1078 = vmatpush.xpose.msra.mxu0 %v559
        %1079 = vmatpush.xpose.msra.mxu0 %v556
        %1080 = vmatpush.xpose.msra.mxu0 %v553
        %1081 = vmatpush.xpose.msra.mxu0 %v550
        %1082 = vmatpush.xpose.msra.mxu0 %v547
        %1083 = vmatmul.f32.gmra.mxu0 %v397
        %v1084 = vpop.f32.mrf.mxu0
        %v1085 = vadd.f32 %v1014, %v1084
        %1086 = vmatmul.f32.gmra.mxu0 %v400
        %v1087 = vpop.f32.mrf.mxu0
        %v1088 = vadd.f32 %v1017, %v1087
        %1089 = vmatmul.f32.gmra.mxu0 %v403
        %v1090 = vpop.f32.mrf.mxu0
        %v1091 = vadd.f32 %v1020, %v1090
        %1092 = vmatmul.f32.gmra.mxu0 %v406
        %v1093 = vpop.f32.mrf.mxu0
        %v1094 = vadd.f32 %v1023, %v1093
        %1095 = vmatmul.f32.gmra.mxu0 %v409
        %v1096 = vpop.f32.mrf.mxu0
        %v1097 = vadd.f32 %v1026, %v1096
        %1098 = vmatmul.f32.gmra.mxu0 %v412
        %v1099 = vpop.f32.mrf.mxu0
        %v1100 = vadd.f32 %v1029, %v1099
        %1101 = vmatmul.f32.gmra.mxu0 %v415
        %v1102 = vpop.f32.mrf.mxu0
        %v1103 = vadd.f32 %v1032, %v1102
        %1104 = vmatmul.f32.gmra.mxu0 %v418
        %v1105 = vpop.f32.mrf.mxu0
        %v1106 = vadd.f32 %v1035, %v1105
        %1107 = vmatmul.f32.gmra.mxu0 %v421
        %v1108 = vpop.f32.mrf.mxu0
        %v1109 = vadd.f32 %v1038, %v1108
        %1110 = vmatmul.f32.gmra.mxu0 %v424
        %v1111 = vpop.f32.mrf.mxu0
        %v1112 = vadd.f32 %v1041, %v1111
        %1113 = vmatmul.f32.gmra.mxu0 %v427
        %v1114 = vpop.f32.mrf.mxu0
        %v1115 = vadd.f32 %v1044, %v1114
        %1116 = vmatmul.f32.gmra.mxu0 %v430
        %v1117 = vpop.f32.mrf.mxu0
        %v1118 = vadd.f32 %v1047, %v1117
        %1119 = vmatmul.f32.gmra.mxu0 %v433
        %v1120 = vpop.f32.mrf.mxu0
        %v1121 = vadd.f32 %v1050, %v1120
        %1122 = vmatmul.f32.gmra.mxu0 %v436
        %v1123 = vpop.f32.mrf.mxu0
        %v1124 = vadd.f32 %v1053, %v1123
        %1125 = vmatmul.f32.gmra.mxu0 %v439
        %v1126 = vpop.f32.mrf.mxu0
        %v1127 = vadd.f32 %v1056, %v1126
        %1128 = vmatmul.f32.gmra.mxu0 %v442
        %v1129 = vpop.f32.mrf.mxu0
        %v1130 = vadd.f32 %v1059, %v1129
        %1131 = vmatmul.f32.gmra.mxu0 %v445
        %v1132 = vpop.f32.mrf.mxu0
        %v1133 = vadd.f32 %v1062, %v1132
        %1134 = vmatmul.f32.gmra.mxu0 %v448
        %v1135 = vpop.f32.mrf.mxu0
        %v1136 = vadd.f32 %v1065, %v1135
        %1137 = vdwg.mxu0
        %1138 = vmatpush.xpose.msra.mxu0 0.0
        %1139 = vmatpush.xpose.msra.mxu0 0.0
        %1140 = vmatpush.xpose.msra.mxu0 0.0
        %1141 = vmatpush.xpose.msra.mxu0 0.0
        %1142 = vmatpush.xpose.msra.mxu0 0.0
        %1143 = vmatpush.xpose.msra.mxu0 0.0
        %1144 = vmatpush.xpose.msra.mxu0 0.0
        %1145 = vmatpush.xpose.msra.mxu0 0.0
        %1146 = vmatpush.xpose.msra.mxu0 %v569
        %1147 = vmatpush.xpose.msra.mxu0 %v566
        %1148 = vmatpush.xpose.msra.mxu0 %v563
        %1149 = vmatpush.xpose.msra.mxu0 %v560
        %1150 = vmatpush.xpose.msra.mxu0 %v557
        %1151 = vmatpush.xpose.msra.mxu0 %v554
        %1152 = vmatpush.xpose.msra.mxu0 %v551
        %1153 = vmatpush.xpose.msra.mxu0 %v548
        %1154 = vmatmul.f32.gmra.mxu0 %v398
        %v1155 = vpop.f32.mrf.mxu0
        %v1156 = vadd.f32 %v1085, %v1155
        %1157 = vmatmul.f32.gmra.mxu0 %v401
        %v1158 = vpop.f32.mrf.mxu0
        %v1159 = vadd.f32 %v1088, %v1158
        %1160 = vmatmul.f32.gmra.mxu0 %v404
        %v1161 = vpop.f32.mrf.mxu0
        %v1162 = vadd.f32 %v1091, %v1161
        %1163 = vmatmul.f32.gmra.mxu0 %v407
        %v1164 = vpop.f32.mrf.mxu0
        %v1165 = vadd.f32 %v1094, %v1164
        %1166 = vmatmul.f32.gmra.mxu0 %v410
        %v1167 = vpop.f32.mrf.mxu0
        %v1168 = vadd.f32 %v1097, %v1167
        %1169 = vmatmul.f32.gmra.mxu0 %v413
        %v1170 = vpop.f32.mrf.mxu0
        %v1171 = vadd.f32 %v1100, %v1170
        %1172 = vmatmul.f32.gmra.mxu0 %v416
        %v1173 = vpop.f32.mrf.mxu0
        %v1174 = vadd.f32 %v1103, %v1173
        %1175 = vmatmul.f32.gmra.mxu0 %v419
        %v1176 = vpop.f32.mrf.mxu0
        %v1177 = vadd.f32 %v1106, %v1176
        %1178 = vmatmul.f32.gmra.mxu0 %v422
        %v1179 = vpop.f32.mrf.mxu0
        %v1180 = vadd.f32 %v1109, %v1179
        %1181 = vmatmul.f32.gmra.mxu0 %v425
        %v1182 = vpop.f32.mrf.mxu0
        %v1183 = vadd.f32 %v1112, %v1182
        %1184 = vmatmul.f32.gmra.mxu0 %v428
        %v1185 = vpop.f32.mrf.mxu0
        %v1186 = vadd.f32 %v1115, %v1185
        %1187 = vmatmul.f32.gmra.mxu0 %v431
        %v1188 = vpop.f32.mrf.mxu0
        %v1189 = vadd.f32 %v1118, %v1188
        %1190 = vmatmul.f32.gmra.mxu0 %v434
        %v1191 = vpop.f32.mrf.mxu0
        %v1192 = vadd.f32 %v1121, %v1191
        %1193 = vmatmul.f32.gmra.mxu0 %v437
        %v1194 = vpop.f32.mrf.mxu0
        %v1195 = vadd.f32 %v1124, %v1194
        %1196 = vmatmul.f32.gmra.mxu0 %v440
        %v1197 = vpop.f32.mrf.mxu0
        %v1198 = vadd.f32 %v1127, %v1197
        %1199 = vmatmul.f32.gmra.mxu0 %v443
        %v1200 = vpop.f32.mrf.mxu0
        %v1201 = vadd.f32 %v1130, %v1200
        %1202 = vmatmul.f32.gmra.mxu0 %v446
        %v1203 = vpop.f32.mrf.mxu0
        %v1204 = vadd.f32 %v1133, %v1203
        %1205 = vmatmul.f32.gmra.mxu0 %v449
        %v1206 = vpop.f32.mrf.mxu0
        %v1207 = vadd.f32 %v1136, %v1206
        %1208 = vdwg.mxu0
        %v1209 = vadd.f32 %v342, %v730
        %v1210 = vadd.f32 %v343, %v943
        %v1211 = vadd.f32 %v344, %v1156
        %v1212 = vadd.f32 %v345, %v733
        %v1213 = vadd.f32 %v346, %v946
        %v1214 = vadd.f32 %v347, %v1159
        %v1215 = vadd.f32 %v348, %v736
        %v1216 = vadd.f32 %v349, %v949
        %v1217 = vadd.f32 %v350, %v1162
        %v1218 = vadd.f32 %v351, %v739
        %v1219 = vadd.f32 %v352, %v952
        %v1220 = vadd.f32 %v353, %v1165
        %v1221 = vadd.f32 %v354, %v742
        %v1222 = vadd.f32 %v355, %v955
        %v1223 = vadd.f32 %v356, %v1168
        %v1224 = vadd.f32 %v357, %v745
        %v1225 = vadd.f32 %v358, %v958
        %v1226 = vadd.f32 %v359, %v1171
        %v1227 = vadd.f32 %v360, %v748
        %v1228 = vadd.f32 %v361, %v961
        %v1229 = vadd.f32 %v362, %v1174
        %v1230 = vadd.f32 %v363, %v751
        %v1231 = vadd.f32 %v364, %v964
        %v1232 = vadd.f32 %v365, %v1177
        %v1233 = vadd.f32 %v366, %v754
        %v1234 = vadd.f32 %v367, %v967
        %v1235 = vadd.f32 %v368, %v1180
        %v1236 = vadd.f32 %v369, %v757
        %v1237 = vadd.f32 %v370, %v970
        %v1238 = vadd.f32 %v371, %v1183
        %v1239 = vadd.f32 %v372, %v760
        %v1240 = vadd.f32 %v373, %v973
        %v1241 = vadd.f32 %v374, %v1186
        %v1242 = vadd.f32 %v375, %v763
        %v1243 = vadd.f32 %v376, %v976
        %v1244 = vadd.f32 %v377, %v1189
        %v1245 = vadd.f32 %v378, %v766
        %v1246 = vadd.f32 %v379, %v979
        %v1247 = vadd.f32 %v380, %v1192
        %v1248 = vadd.f32 %v381, %v769
        %v1249 = vadd.f32 %v382, %v982
        %v1250 = vadd.f32 %v383, %v1195
        %v1251 = vadd.f32 %v384, %v772
        %v1252 = vadd.f32 %v385, %v985
        %v1253 = vadd.f32 %v386, %v1198
        %v1254 = vadd.f32 %v387, %v775
        %v1255 = vadd.f32 %v388, %v988
        %v1256 = vadd.f32 %v389, %v1201
        %v1257 = vadd.f32 %v390, %v778
        %v1258 = vadd.f32 %v391, %v991
        %v1259 = vadd.f32 %v392, %v1204
        %v1260 = vadd.f32 %v393, %v781
        %v1261 = vadd.f32 %v394, %v994
        %v1262 = vadd.f32 %v395, %v1207
        %1263 = vst [vmem:[#allocation2] sm:$0xff] %v1209
        %1264 = vst [vmem:[#allocation2 + $0x8] sm:$0xff] %v1210
        %vm1265 = vcmask 523264
        %1266 = vst.msk [vmem:[#allocation2 + $0x10] sm:$0xff] %vm1265, %v1211
        %1267 = vst [vmem:[#allocation2 + $0x18] sm:$0xff] %v1212
        %1268 = vst [vmem:[#allocation2 + $0x20] sm:$0xff] %v1213
        %1269 = vst.msk [vmem:[#allocation2 + $0x28] sm:$0xff] %vm1265, %v1214
        %1270 = vst [vmem:[#allocation2 + $0x30] sm:$0xff] %v1215
        %1271 = vst [vmem:[#allocation2 + $0x38] sm:$0xff] %v1216
        %1272 = vst.msk [vmem:[#allocation2 + $0x40] sm:$0xff] %vm1265, %v1217
        %1273 = vst [vmem:[#allocation2 + $0x48] sm:$0xff] %v1218
        %1274 = vst [vmem:[#allocation2 + $0x50] sm:$0xff] %v1219
        %1275 = vst.msk [vmem:[#allocation2 + $0x58] sm:$0xff] %vm1265, %v1220
        %1276 = vst [vmem:[#allocation2 + $0x60] sm:$0xff] %v1221
        %1277 = vst [vmem:[#allocation2 + $0x68] sm:$0xff] %v1222
        %1278 = vst.msk [vmem:[#allocation2 + $0x70] sm:$0xff] %vm1265, %v1223
        %1279 = vst [vmem:[#allocation2 + $0x78] sm:$0xff] %v1224
        %1280 = vst [vmem:[#allocation2 + $0x80] sm:$0xff] %v1225
        %1281 = vst.msk [vmem:[#allocation2 + $0x88] sm:$0xff] %vm1265, %v1226
        %1282 = vst [vmem:[#allocation2 + $0x90] sm:$0xff] %v1227
        %1283 = vst [vmem:[#allocation2 + $0x98] sm:$0xff] %v1228
        %1284 = vst.msk [vmem:[#allocation2 + $0xa0] sm:$0xff] %vm1265, %v1229
        %1285 = vst [vmem:[#allocation2 + $0xa8] sm:$0xff] %v1230
        %1286 = vst [vmem:[#allocation2 + $0xb0] sm:$0xff] %v1231
        %1287 = vst.msk [vmem:[#allocation2 + $0xb8] sm:$0xff] %vm1265, %v1232
        %1288 = vst [vmem:[#allocation2 + $0xc0] sm:$0xff] %v1233
        %1289 = vst [vmem:[#allocation2 + $0xc8] sm:$0xff] %v1234
        %1290 = vst.msk [vmem:[#allocation2 + $0xd0] sm:$0xff] %vm1265, %v1235
        %1291 = vst [vmem:[#allocation2 + $0xd8] sm:$0xff] %v1236
        %1292 = vst [vmem:[#allocation2 + $0xe0] sm:$0xff] %v1237
        %1293 = vst.msk [vmem:[#allocation2 + $0xe8] sm:$0xff] %vm1265, %v1238
        %1294 = vst [vmem:[#allocation2 + $0xf0] sm:$0xff] %v1239
        %1295 = vst [vmem:[#allocation2 + $0xf8] sm:$0xff] %v1240
        %1296 = vst.msk [vmem:[#allocation2 + $0x100] sm:$0xff] %vm1265, %v1241
        %1297 = vst [vmem:[#allocation2 + $0x108] sm:$0xff] %v1242
        %1298 = vst [vmem:[#allocation2 + $0x110] sm:$0xff] %v1243
        %1299 = vst.msk [vmem:[#allocation2 + $0x118] sm:$0xff] %vm1265, %v1244
        %1300 = vst [vmem:[#allocation2 + $0x120] sm:$0xff] %v1245
        %1301 = vst [vmem:[#allocation2 + $0x128] sm:$0xff] %v1246
        %1302 = vst.msk [vmem:[#allocation2 + $0x130] sm:$0xff] %vm1265, %v1247
        %1303 = vst [vmem:[#allocation2 + $0x138] sm:$0xff] %v1248
        %1304 = vst [vmem:[#allocation2 + $0x140] sm:$0xff] %v1249
        %1305 = vst.msk [vmem:[#allocation2 + $0x148] sm:$0xff] %vm1265, %v1250
        %1306 = vst [vmem:[#allocation2 + $0x150] sm:$0xff] %v1251
        %1307 = vst [vmem:[#allocation2 + $0x158] sm:$0xff] %v1252
        %1308 = vst.msk [vmem:[#allocation2 + $0x160] sm:$0xff] %vm1265, %v1253
        %1309 = vst [vmem:[#allocation2 + $0x168] sm:$0xff] %v1254
        %1310 = vst [vmem:[#allocation2 + $0x170] sm:$0xff] %v1255
        %1311 = vst.msk [vmem:[#allocation2 + $0x178] sm:$0xff] %vm1265, %v1256
        %1312 = vst [vmem:[#allocation2 + $0x180] sm:$0xff] %v1257
        %1313 = vst [vmem:[#allocation2 + $0x188] sm:$0xff] %v1258
        %1314 = vst.msk [vmem:[#allocation2 + $0x190] sm:$0xff] %vm1265, %v1259
        %1315 = vst [vmem:[#allocation2 + $0x198] sm:$0xff] %v1260
        %1316 = vst [vmem:[#allocation2 + $0x1a0] sm:$0xff] %v1261
        %1317 = vst.msk [vmem:[#allocation2 + $0x1a8] sm:$0xff] %vm1265, %v1262
        // Predicated region
        $region49: #{tpu_custom_call.1} parent=31 // pred_check
          %p1318 = pneg %p275
        $region50: #{tpu_custom_call.1} parent=31 // pred_check_branch
          %1320 = sbr.rel (%p1318) target = $region52
        $region51: #{tpu_custom_call.1} parent=31 // pred_region
          %v1321 = vld [vmem:[#allocation2] sm:$0xff]
          %v1322 = vld [vmem:[#allocation2 + $0x8] sm:$0xff]
          %v1323 = vld [vmem:[#allocation2 + $0x10] sm:$0xff]
          %v1324 = vld [vmem:[#allocation2 + $0x18] sm:$0xff]
          %v1325 = vld [vmem:[#allocation2 + $0x20] sm:$0xff]
          %v1326 = vld [vmem:[#allocation2 + $0x28] sm:$0xff]
          %v1327 = vld [vmem:[#allocation2 + $0x30] sm:$0xff]
          %v1328 = vld [vmem:[#allocation2 + $0x38] sm:$0xff]
          %v1329 = vld [vmem:[#allocation2 + $0x40] sm:$0xff]
          %v1330 = vld [vmem:[#allocation2 + $0x48] sm:$0xff]
          %v1331 = vld [vmem:[#allocation2 + $0x50] sm:$0xff]
          %v1332 = vld [vmem:[#allocation2 + $0x58] sm:$0xff]
          %v1333 = vld [vmem:[#allocation2 + $0x60] sm:$0xff]
          %v1334 = vld [vmem:[#allocation2 + $0x68] sm:$0xff]
          %v1335 = vld [vmem:[#allocation2 + $0x70] sm:$0xff]
          %v1336 = vld [vmem:[#allocation2 + $0x78] sm:$0xff]
          %v1337 = vld [vmem:[#allocation2 + $0x80] sm:$0xff]
          %v1338 = vld [vmem:[#allocation2 + $0x88] sm:$0xff]
          %v1339 = vld [vmem:[#allocation2 + $0x90] sm:$0xff]
          %v1340 = vld [vmem:[#allocation2 + $0x98] sm:$0xff]
          %v1341 = vld [vmem:[#allocation2 + $0xa0] sm:$0xff]
          %v1342 = vld [vmem:[#allocation2 + $0xa8] sm:$0xff]
          %v1343 = vld [vmem:[#allocation2 + $0xb0] sm:$0xff]
          %v1344 = vld [vmem:[#allocation2 + $0xb8] sm:$0xff]
          %v1345 = vld [vmem:[#allocation2 + $0xc0] sm:$0xff]
          %v1346 = vld [vmem:[#allocation2 + $0xc8] sm:$0xff]
          %v1347 = vld [vmem:[#allocation2 + $0xd0] sm:$0xff]
          %v1348 = vld [vmem:[#allocation2 + $0xd8] sm:$0xff]
          %v1349 = vld [vmem:[#allocation2 + $0xe0] sm:$0xff]
          %v1350 = vld [vmem:[#allocation2 + $0xe8] sm:$0xff]
          %v1351 = vld [vmem:[#allocation2 + $0xf0] sm:$0xff]
          %v1352 = vld [vmem:[#allocation2 + $0xf8] sm:$0xff]
          %v1353 = vld [vmem:[#allocation2 + $0x100] sm:$0xff]
          %v1354 = vld [vmem:[#allocation2 + $0x108] sm:$0xff]
          %v1355 = vld [vmem:[#allocation2 + $0x110] sm:$0xff]
          %v1356 = vld [vmem:[#allocation2 + $0x118] sm:$0xff]
          %v1357 = vld [vmem:[#allocation2 + $0x120] sm:$0xff]
          %v1358 = vld [vmem:[#allocation2 + $0x128] sm:$0xff]
          %v1359 = vld [vmem:[#allocation2 + $0x130] sm:$0xff]
          %v1360 = vld [vmem:[#allocation2 + $0x138] sm:$0xff]
          %v1361 = vld [vmem:[#allocation2 + $0x140] sm:$0xff]
          %v1362 = vld [vmem:[#allocation2 + $0x148] sm:$0xff]
          %v1363 = vld [vmem:[#allocation2 + $0x150] sm:$0xff]
          %v1364 = vld [vmem:[#allocation2 + $0x158] sm:$0xff]
          %v1365 = vld [vmem:[#allocation2 + $0x160] sm:$0xff]
          %v1366 = vld [vmem:[#allocation2 + $0x168] sm:$0xff]
          %v1367 = vld [vmem:[#allocation2 + $0x170] sm:$0xff]
          %v1368 = vld [vmem:[#allocation2 + $0x178] sm:$0xff]
          %v1369 = vld [vmem:[#allocation2 + $0x180] sm:$0xff]
          %v1370 = vld [vmem:[#allocation2 + $0x188] sm:$0xff]
          %v1371 = vld [vmem:[#allocation2 + $0x190] sm:$0xff]
          %v1372 = vld [vmem:[#allocation2 + $0x198] sm:$0xff]
          %v1373 = vld [vmem:[#allocation2 + $0x1a0] sm:$0xff]
          %v1374 = vld [vmem:[#allocation2 + $0x1a8] sm:$0xff]
          %1375 = vst [vmem:[%s267] sm:$0xff] %v1321
          %1376 = vst [vmem:[%s267 + $0x8] sm:$0xff] %v1322
          %1377 = vst.msk [vmem:[%s267 + $0x10] sm:$0xff] %vm1265, %v1323
          %1378 = vst [vmem:[%s267 + $0x18] sm:$0xff] %v1324
          %1379 = vst [vmem:[%s267 + $0x20] sm:$0xff] %v1325
          %1380 = vst.msk [vmem:[%s267 + $0x28] sm:$0xff] %vm1265, %v1326
          %1381 = vst [vmem:[%s267 + $0x30] sm:$0xff] %v1327
          %1382 = vst [vmem:[%s267 + $0x38] sm:$0xff] %v1328
          %1383 = vst.msk [vmem:[%s267 + $0x40] sm:$0xff] %vm1265, %v1329
          %1384 = vst [vmem:[%s267 + $0x48] sm:$0xff] %v1330
          %1385 = vst [vmem:[%s267 + $0x50] sm:$0xff] %v1331
          %1386 = vst.msk [vmem:[%s267 + $0x58] sm:$0xff] %vm1265, %v1332
          %1387 = vst [vmem:[%s267 + $0x60] sm:$0xff] %v1333
          %1388 = vst [vmem:[%s267 + $0x68] sm:$0xff] %v1334
          %1389 = vst.msk [vmem:[%s267 + $0x70] sm:$0xff] %vm1265, %v1335
          %1390 = vst [vmem:[%s267 + $0x78] sm:$0xff] %v1336
          %1391 = vst [vmem:[%s267 + $0x80] sm:$0xff] %v1337
          %1392 = vst.msk [vmem:[%s267 + $0x88] sm:$0xff] %vm1265, %v1338
          %1393 = vst [vmem:[%s267 + $0x90] sm:$0xff] %v1339
          %1394 = vst [vmem:[%s267 + $0x98] sm:$0xff] %v1340
          %1395 = vst.msk [vmem:[%s267 + $0xa0] sm:$0xff] %vm1265, %v1341
          %1396 = vst [vmem:[%s267 + $0xa8] sm:$0xff] %v1342
          %1397 = vst [vmem:[%s267 + $0xb0] sm:$0xff] %v1343
          %1398 = vst.msk [vmem:[%s267 + $0xb8] sm:$0xff] %vm1265, %v1344
          %1399 = vst [vmem:[%s267 + $0xc0] sm:$0xff] %v1345
          %1400 = vst [vmem:[%s267 + $0xc8] sm:$0xff] %v1346
          %1401 = vst.msk [vmem:[%s267 + $0xd0] sm:$0xff] %vm1265, %v1347
          %1402 = vst [vmem:[%s267 + $0xd8] sm:$0xff] %v1348
          %1403 = vst [vmem:[%s267 + $0xe0] sm:$0xff] %v1349
          %1404 = vst.msk [vmem:[%s267 + $0xe8] sm:$0xff] %vm1265, %v1350
          %1405 = vst [vmem:[%s267 + $0xf0] sm:$0xff] %v1351
          %1406 = vst [vmem:[%s267 + $0xf8] sm:$0xff] %v1352
          %1407 = vst.msk [vmem:[%s267 + $0x100] sm:$0xff] %vm1265, %v1353
          %1408 = vst [vmem:[%s267 + $0x108] sm:$0xff] %v1354
          %1409 = vst [vmem:[%s267 + $0x110] sm:$0xff] %v1355
          %1410 = vst.msk [vmem:[%s267 + $0x118] sm:$0xff] %vm1265, %v1356
          %1411 = vst [vmem:[%s267 + $0x120] sm:$0xff] %v1357
          %1412 = vst [vmem:[%s267 + $0x128] sm:$0xff] %v1358
          %1413 = vst.msk [vmem:[%s267 + $0x130] sm:$0xff] %vm1265, %v1359
          %1414 = vst [vmem:[%s267 + $0x138] sm:$0xff] %v1360
          %1415 = vst [vmem:[%s267 + $0x140] sm:$0xff] %v1361
          %1416 = vst.msk [vmem:[%s267 + $0x148] sm:$0xff] %vm1265, %v1362
          %1417 = vst [vmem:[%s267 + $0x150] sm:$0xff] %v1363
          %1418 = vst [vmem:[%s267 + $0x158] sm:$0xff] %v1364
          %1419 = vst.msk [vmem:[%s267 + $0x160] sm:$0xff] %vm1265, %v1365
          %1420 = vst [vmem:[%s267 + $0x168] sm:$0xff] %v1366
          %1421 = vst [vmem:[%s267 + $0x170] sm:$0xff] %v1367
          %1422 = vst.msk [vmem:[%s267 + $0x178] sm:$0xff] %vm1265, %v1368
          %1423 = vst [vmem:[%s267 + $0x180] sm:$0xff] %v1369
          %1424 = vst [vmem:[%s267 + $0x188] sm:$0xff] %v1370
          %1425 = vst.msk [vmem:[%s267 + $0x190] sm:$0xff] %vm1265, %v1371
          %1426 = vst [vmem:[%s267 + $0x198] sm:$0xff] %v1372
          %1427 = vst [vmem:[%s267 + $0x1a0] sm:$0xff] %v1373
          %1428 = vst.msk [vmem:[%s267 + $0x1a8] sm:$0xff] %vm1265, %v1374
        $region52: #{tpu_custom_call.1} parent=31 // pred_fallthru
          _
        %s1429 = sand.u32 %s132, 1
        %s1430 = scalar_lea.sflag [#allocation5], %s1429
        %s1431 = sand.u32 %s132, 1
        %s1432 = smul.addr %s1431, 432
        %s1433 = scalar_lea.vmem [#allocation9], %s1432
        // Predicated region
        $region53: #{tpu_custom_call.1} parent=31 // pred_check
          %p1434 = pneg %p142
        $region54: #{tpu_custom_call.1} parent=31 // pred_check_branch
          %1436 = sbr.rel (%p1434) target = $region56
        $region55: #{tpu_custom_call.1} parent=31 // pred_region
          %s1437 = smul.u32 18, %s26
          %s1438 = smul.u32 3, %s27
          %1440 = vsyncadd %s1430, 0
          %s1441 = smul.addr %s1437, 3
          %s1442 = sadd.s32 %s1438, %s1441
          %s1443 = smul.addr %s1442, 8
          %s1444 = scalar_lea.hbm %s3, %s1443
          %s1445 = sshll.u32 %s1433, 4
          %s1446 = int_to_ptr.vmem [resolvable:$true] %s1445
          %s1447 = sshll.u32 %s1444, 4
          %s1448 = int_to_ptr.hbm [resolvable:$true] %s1447
          %1453 = dma.vmem_to_hbm [thread:$0]  %s1446, 6912, %s1448, %s1430, 384, 384, 24
        $region56: #{tpu_custom_call.1} parent=31 // pred_fallthru
          _
      $region32: #{tpu_custom_call.1} parent=5 // pred_fallthru
        _
      %p1454 = scmp.le.s32.totalorder 2, %s16
      // Predicated region
      $region57: #{tpu_custom_call.1} parent=5 // pred_check
        %p1455 = pneg %p1454
      $region58: #{tpu_custom_call.1} parent=5 // pred_check_branch
        %1457 = sbr.rel (%p1455) target = $region60
      $region59: #{tpu_custom_call.1} parent=5 // pred_region
        %s1458 = ssub.s32 %s16, 2
        // Predicated region
        $region61: #{tpu_custom_call.1} parent=59 // pred_check
          %p1459 = pneg %p148
        $region62: #{tpu_custom_call.1} parent=59 // pred_check_branch
          %1461 = sbr.rel (%p1459) target = $region64
        $region63: #{tpu_custom_call.1} parent=59 // pred_region
          %s1462 = sand.u32 %s133, 1
          %s1463 = scalar_lea.sflag [#allocation5], %s1462
          %s1464 = sand.u32 %s133, 1
          %s1465 = smul.addr %s1464, 432
          %s1466 = scalar_lea.vmem [#allocation9], %s1465
          %1468 = dma.done %s1463, 6912
        $region64: #{tpu_custom_call.1} parent=59 // pred_fallthru
          _
      $region60: #{tpu_custom_call.1} parent=5 // pred_fallthru
        _
    $region6: #{tpu_custom_call.1} parent=1 // loop_footer
      %s20 = sadd.s32 1, %s16
    $region7: #{tpu_custom_call.1} parent=1 // loop_footer_branch
      %15 = sbr.rel target = $region3
    $region8: #{tpu_custom_call.1} parent=1 // loop_exit
      _
    %1469 = vsyncpa [#allocation4], 1
    %s1470 = scalar_lea.sflag [#allocation4], 1
    %1471 = vsyncpa %s1470, 1
    %1472 = vsyncpa [#allocation7], 1
    %1473 = vsyncpa [#allocation5], 1
    %s1474 = scalar_lea.sflag [#allocation5], 1
    %1475 = vsyncpa %s1474, 1

</llo_original>
